<compile_context>
chip_gen: v7x
topology: tpu7x:2x2x1
jax: 0.10.0
libtpu: 0.0.40
codegen_flags: <defaults>
</compile_context>

<pallas_src>
import jax
import jax.numpy as jnp
from jax.experimental import pallas as pl
from jax.experimental.pallas import tpu as pltpu


NEG_SLOPE = 0.2


# ----------------------------------------------------------------------------
# Pallas kernel: out = leaky_relu(sum_i patches_i @ W_i + b)
#   grid = (row tiles, out-channel tiles, K tiles)  -- K innermost, arbitrary
# ----------------------------------------------------------------------------
def _make_mm_bias_lrelu_kernel(n_inputs):
    """Builds kernel(p_0..p_{n-1}, w_0..w_{n-1}, b, o, acc)."""

    def kernel(*refs):
        p_refs = refs[:n_inputs]
        w_refs = refs[n_inputs:2 * n_inputs]
        b_ref, o_ref, acc_ref = refs[2 * n_inputs:]
        k = pl.program_id(2)

        @pl.when(k == 0)
        def _():
            acc_ref[...] = jnp.zeros_like(acc_ref)

        acc = acc_ref[...]
        for p_ref, w_ref in zip(p_refs, w_refs):
            acc = acc + jnp.dot(p_ref[...], w_ref[...],
                                preferred_element_type=jnp.float32)
        acc_ref[...] = acc

        @pl.when(k == pl.num_programs(2) - 1)
        def _():
            y = acc_ref[...] + b_ref[...]
            o_ref[...] = jnp.maximum(y, NEG_SLOPE * y).astype(o_ref.dtype)

    return kernel


# ----------------------------------------------------------------------------
# Tiling helpers
# ----------------------------------------------------------------------------
def _round_up(x, m):
    return ((x + m - 1) // m) * m


def _pick_k_tile(k_pad, cap=1024):
    """Largest multiple of 128 that divides k_pad and is <= cap."""
    best, t = 128, 128
    while t <= min(k_pad, cap):
        if k_pad % t == 0:
            best = t
        t += 128
    return best


def _pick_row_tile(m, n_col_tiles, cap=512):
    """Multiple of 128, <= cap; only grow while (row tiles * col tiles) >= 4
    so both v7x TensorCores keep enough parallel grid steps."""
    tm = 128
    while tm * 2 <= cap and tm * 2 <= m and pl.cdiv(m, tm * 2) * n_col_tiles >= 4:
        tm *= 2
    return tm


def _pad2d(a, rows, cols):
    pr, pc = rows - a.shape[0], cols - a.shape[1]
    if pr == 0 and pc == 0:
        return a
    return jnp.pad(a, ((0, pr), (0, pc)))


# ----------------------------------------------------------------------------
# Pallas wrapper
# ----------------------------------------------------------------------------
def fused_matmul_bias_lrelu(patches, weights, bias, out_dtype=jnp.float32):
    """leaky_relu(sum_i patches[i] @ weights[i] + bias) on the MXU.

    patches: list of (M, K) arrays (bf16 preferred), all the same shape.
    weights: list of (K, C) arrays.  bias: (C,).
    """
    n_in = len(patches)
    M, K = patches[0].shape
    C = weights[0].shape[1]

    C_pad = _round_up(C, 128)                 # lane-dense output stores
    K_pad = _round_up(K, 128)                 # aligned MXU contraction
    tn = 256 if C_pad % 256 == 0 else 128     # 256-wide MXU on v6e/v7x
    tk = _pick_k_tile(K_pad)
    n_col_tiles = C_pad // tn
    tm = _pick_row_tile(M, n_col_tiles)
    M_pad = _round_up(M, tm)

    p_args = [_pad2d(p.astype(jnp.bfloat16), M_pad, K_pad) for p in patches]
    w_args = [_pad2d(w, K_pad, C_pad).astype(jnp.bfloat16) for w in weights]
    b_arg = _pad2d(bias.reshape(1, C).astype(jnp.float32), 1, C_pad)

    grid = (M_pad // tm, C_pad // tn, K_pad // tk)

    in_specs = (
        [pl.BlockSpec((tm, tk), lambda i, j, k: (i, k)) for _ in range(n_in)]
        + [pl.BlockSpec((tk, tn), lambda i, j, k: (k, j)) for _ in range(n_in)]
        + [pl.BlockSpec((1, tn), lambda i, j, k: (0, j))]
    )
    out_spec = pl.BlockSpec((tm, tn), lambda i, j, k: (i, j))

    # VMEM budget: double-buffered bf16 patch/weight tiles, out tiles, f32 acc.
    out_itemsize = jnp.dtype(out_dtype).itemsize
    tile_bytes = (
        n_in * 2 * (tm * tk * 2)           # patch tiles (bf16, 2 buffers)
        + n_in * 2 * (tk * tn * 2)         # weight tiles (bf16, 2 buffers)
        + 2 * (tn * 4)                     # bias
        + 2 * (tm * tn * out_itemsize)     # output tiles
        + tm * tn * 4                      # f32 accumulator
    )
    vmem_limit = min(2 * tile_bytes + (8 << 20), 64 << 20)

    out = pl.pallas_call(
        _make_mm_bias_lrelu_kernel(n_in),
        out_shape=jax.ShapeDtypeStruct((M_pad, C_pad), out_dtype),
        grid_spec=pltpu.PrefetchScalarGridSpec(
            num_scalar_prefetch=0,
            grid=grid,
            in_specs=in_specs,
            out_specs=out_spec,
            scratch_shapes=[pltpu.VMEM((tm, tn), jnp.float32)],
        ),
        compiler_params=pltpu.CompilerParams(
            dimension_semantics=("parallel", "parallel", "arbitrary"),
            vmem_limit_bytes=int(vmem_limit),
        ),
    )(*p_args, *w_args, b_arg)
    return out[:M, :C]


# ----------------------------------------------------------------------------
# Plain-JAX glue: im2col, weight layout, spectral norm, init
# ----------------------------------------------------------------------------
def im2col(x_nhwc, ksize, stride, pad):
    """Rows in N,OH,OW raster order; columns ordered (kh, kw, in_ch)."""
    x = jnp.pad(x_nhwc, ((0, 0), (pad, pad), (pad, pad), (0, 0)))
    N, Hp, Wp, C = x.shape
    oh = (Hp - ksize) // stride + 1
    ow = (Wp - ksize) // stride + 1
    cols = []
    for i in range(ksize):
        for j in range(ksize):
            cols.append(
                x[:, i: i + stride * oh: stride, j: j + stride * ow: stride, :]
            )
    patches = jnp.stack(cols, axis=-2)  # [N, oh, ow, kh*kw, C]
    return patches.reshape(N * oh * ow, ksize * ksize * C), oh, ow


def weight_to_mat(w_oihw):
    """[out_ch, in_ch, kh, kw] -> [kh*kw*in_ch, out_ch] matching im2col cols."""
    oc = w_oihw.shape[0]
    return jnp.transpose(w_oihw, (2, 3, 1, 0)).reshape(-1, oc)


def spectral_normalize(w_oihw, key, n_power_iterations=1, eps=1e-12):
    """Mimics torch spectral_norm on the first forward (1 power iteration)."""
    oc = w_oihw.shape[0]
    wm = w_oihw.reshape(oc, -1)
    u = jax.random.normal(key, (oc,), dtype=jnp.float32)
    u = u / (jnp.linalg.norm(u) + eps)
    v = None
    for _ in range(n_power_iterations):
        v = wm.T @ u
        v = v / (jnp.linalg.norm(v) + eps)
        u = wm @ v
        u = u / (jnp.linalg.norm(u) + eps)
    sigma = u @ (wm @ v)
    return w_oihw / sigma


def init_params(key, in_ch, out_ch):
    ks = jax.random.split(key, 9)

    def conv_w(k, oc, ic, kh, kw):
        fan_in = ic * kh * kw
        bound = 1.0 / jnp.sqrt(fan_in)
        return jax.random.uniform(k, (oc, ic, kh, kw), jnp.float32, -bound, bound)

    def conv_b(k, oc, fan_in):
        bound = 1.0 / jnp.sqrt(fan_in)
        return jax.random.uniform(k, (oc,), jnp.float32, -bound, bound)

    w1 = conv_w(ks[0], in_ch, in_ch, 3, 3)
    b1 = conv_b(ks[1], in_ch, in_ch * 9)
    w2 = conv_w(ks[2], out_ch, in_ch, 4, 4)
    b2 = conv_b(ks[3], out_ch, in_ch * 16)
    wskip = conv_w(ks[4], out_ch, in_ch, 4, 4)
    bskip = conv_b(ks[5], out_ch, in_ch * 16)

    # spectral-norm each conv weight (parameter-side transform, plain JAX)
    w1 = spectral_normalize(w1, ks[6])
    w2 = spectral_normalize(w2, ks[7])
    wskip = spectral_normalize(wskip, ks[8])

    return dict(w1=w1, b1=b1, w2=w2, b2=b2, wskip=wskip, bskip=bskip)


@jax.jit
def resblock_down_forward(x_nchw, params):
    # NCHW -> NHWC; cast to bf16 once so im2col emits bf16 patches directly.
    x = jnp.transpose(x_nchw, (0, 2, 3, 1)).astype(jnp.bfloat16)
    N, _, _, Cin = x.shape
    Cout = params["w2"].shape[0]

    # conv1 (3x3, s1, p1) + bias + LeakyReLU -> bf16 h (halves h traffic)
    p1, oh1, ow1 = im2col(x, 3, 1, 1)
    h_flat = fused_matmul_bias_lrelu(
        [p1], [weight_to_mat(params["w1"])], params["b1"],
        out_dtype=jnp.bfloat16)
    h = h_flat.reshape(N, oh1, ow1, Cin)

    # conv2(h) + skip(x) + bias + LeakyReLU, fused as two dot-accumulates in
    # one kernel (no patch/weight concatenation round-trip).
    ph, oh, ow = im2col(h, 4, 2, 1)
    px, _, _ = im2col(x, 4, 2, 1)
    out_flat = fused_matmul_bias_lrelu(
        [ph, px],
        [weight_to_mat(params["w2"]), weight_to_mat(params["wskip"])],
        params["b2"] + params["bskip"],
        out_dtype=jnp.float32,
    )
    out = out_flat.reshape(N, oh, ow, Cout)

    # NHWC -> NCHW
    return jnp.transpose(out, (0, 3, 1, 2))


# ----------------------------------------------------------------------------
# Pure-JAX reference (same bf16-rounded operands, high-precision conv)
# ----------------------------------------------------------------------------
def reference_forward(x_nchw, params):
    bf = lambda a: a.astype(jnp.bfloat16).astype(jnp.float32)

    def conv(x, w, b, stride, pad):
        y = jax.lax.conv_general_dilated(
            bf(x), bf(w),
            window_strides=(stride, stride),
            padding=((pad, pad), (pad, pad)),
            dimension_numbers=("NCHW", "OIHW", "NCHW"),
            precision=jax.lax.Precision.HIGHEST,
        )
        return y + b[None, :, None, None]

    lrelu = lambda v: jnp.where(v >= 0, v, NEG_SLOPE * v)
    skip = conv(x_nchw, params["wskip"], params["bskip"], 2, 1)
    h = lrelu(conv(x_nchw, params["w1"], params["b1"], 1, 1))
    y = conv(h, params["w2"], params["b2"], 2, 1)
    return lrelu(y + skip)


if __name__ == "__main__":
    key = jax.random.PRNGKey(0)
    k_x, k_p = jax.random.split(key)

    N, Cin, Cout, H, W = 2, 4, 8, 16, 16
    x = jax.random.normal(k_x, (N, Cin, H, W), dtype=jnp.float32)
    params = init_params(k_p, Cin, Cout)

    out = jax.block_until_ready(resblock_down_forward(x, params))
    ref = jax.block_until_ready(reference_forward(x, params))

    assert out.shape == (N, Cout, H // 2, W // 2), out.shape
    max_err = float(jnp.max(jnp.abs(out - ref)))
    assert max_err < 5e-3, max_err
    print("KERNEL_OK")
</pallas_src>

<mosaic_0001>
module attributes {stable_mosaic.version = 11 : i64} {
  func.func @kernel(%arg0: i32, %arg1: i32, %arg2: i32, %arg3: memref<128x128xbf16, #tpu.memory_space<vmem>>, %arg4: memref<128x128xbf16, #tpu.memory_space<vmem>>, %arg5: memref<1x128xf32, #tpu.memory_space<vmem>>, %arg6: memref<128x128xbf16, #tpu.memory_space<vmem>>, %arg7: memref<128x128xf32, #tpu.memory_space<vmem>>) attributes {dimension_semantics = [#tpu.dimension_semantics<parallel>, #tpu.dimension_semantics<parallel>, #tpu.dimension_semantics<arbitrary>], iteration_bounds = array<i64: 4, 1, 1>, scalar_prefetch = 0 : i64, scratch_operands = 1 : i64, tpu.core_type = #tpu.core_type<tc>, window_params = [{transform_indices = @transform_0, window_bounds = array<i64: 128, 128>}, {transform_indices = @transform_1, window_bounds = array<i64: 128, 128>}, {transform_indices = @transform_2, window_bounds = array<i64: 1, 128>}, {transform_indices = @transform_3, window_bounds = array<i64: 128, 128>}]} {
    %c0_i32 = arith.constant 0 : i32
    %0 = arith.cmpi eq, %arg2, %c0_i32 : i32
    %1 = arith.extui %0 : i1 to i32
    %c0_i32_0 = arith.constant 0 : i32
    %2 = arith.cmpi ne, %1, %c0_i32_0 : i32
    scf.if %2 {
      %cst_10 = arith.constant 0.000000e+00 : f32
      %12 = vector.broadcast %cst_10 : f32 to vector<128x128xf32>
      %c0_11 = arith.constant 0 : index
      %c0_12 = arith.constant 0 : index
      %13 = vector.load %arg7[%c0_11, %c0_12] : memref<128x128xf32, #tpu.memory_space<vmem>>, vector<128x128xf32>
      tpu.vector_store %arg7[%c0_11, %c0_12], %12 {strides = array<i32>} : memref<128x128xf32, #tpu.memory_space<vmem>>, vector<128x128xf32>,
    } else {
    }
    %c0 = arith.constant 0 : index
    %c0_1 = arith.constant 0 : index
    %3 = vector.load %arg7[%c0, %c0_1] : memref<128x128xf32, #tpu.memory_space<vmem>>, vector<128x128xf32>
    %c0_2 = arith.constant 0 : index
    %c0_3 = arith.constant 0 : index
    %4 = vector.load %arg3[%c0_2, %c0_3] : memref<128x128xbf16, #tpu.memory_space<vmem>>, vector<128x128xbf16>
    %c0_4 = arith.constant 0 : index
    %c0_5 = arith.constant 0 : index
    %5 = vector.load %arg4[%c0_4, %c0_5] : memref<128x128xbf16, #tpu.memory_space<vmem>>, vector<128x128xbf16>
    %cst = arith.constant dense<0.000000e+00> : vector<128x128xf32>
    %6 = tpu.matmul %4, %5, %cst {dimension_numbers = #tpu.dot_dimension_numbers<[1], [0], [0], [1], [0, 0, 1, 1], [], []>} : vector<128x128xbf16>, vector<128x128xbf16>, vector<128x128xf32> -> vector<128x128xf32>
    %7 = arith.addf %3, %6 : vector<128x128xf32>
    %c0_6 = arith.constant 0 : index
    %c0_7 = arith.constant 0 : index
    %8 = vector.load %arg7[%c0_6, %c0_7] : memref<128x128xf32, #tpu.memory_space<vmem>>, vector<128x128xf32>
    tpu.vector_store %arg7[%c0_6, %c0_7], %7 {strides = array<i32>} : memref<128x128xf32, #tpu.memory_space<vmem>>, vector<128x128xf32>,
    %c0_i32_8 = arith.constant 0 : i32
    %9 = arith.cmpi eq, %arg2, %c0_i32_8 : i32
    %10 = arith.extui %9 : i1 to i32
    %c0_i32_9 = arith.constant 0 : i32
    %11 = arith.cmpi ne, %10, %c0_i32_9 : i32
    scf.if %11 {
      %c0_10 = arith.constant 0 : index
      %c0_11 = arith.constant 0 : index
      %12 = vector.load %arg7[%c0_10, %c0_11] : memref<128x128xf32, #tpu.memory_space<vmem>>, vector<128x128xf32>
      %c0_12 = arith.constant 0 : index
      %c0_13 = arith.constant 0 : index
      %13 = vector.load %arg5[%c0_12, %c0_13] : memref<1x128xf32, #tpu.memory_space<vmem>>, vector<1x128xf32>
      %14 = vector.broadcast %13 : vector<1x128xf32> to vector<128x128xf32>
      %15 = arith.addf %12, %14 : vector<128x128xf32>
      %cst_14 = arith.constant 2.000000e-01 : f32
      %16 = vector.broadcast %cst_14 : f32 to vector<128x128xf32>
      %17 = arith.mulf %16, %15 : vector<128x128xf32>
      %18 = arith.maximumf %15, %17 : vector<128x128xf32>
      %19 = arith.truncf %18 : vector<128x128xf32> to vector<128x128xbf16>
      %c0_15 = arith.constant 0 : index
      %c0_16 = arith.constant 0 : index
      %20 = vector.load %arg6[%c0_15, %c0_16] : memref<128x128xbf16, #tpu.memory_space<vmem>>, vector<128x128xbf16>
      tpu.vector_store %arg6[%c0_15, %c0_16], %19 {strides = array<i32>} : memref<128x128xbf16, #tpu.memory_space<vmem>>, vector<128x128xbf16>,
    } else {
    }
    return
  }
  func.func @transform_0(%arg0: i32, %arg1: i32, %arg2: i32) -> (i32, i32) {
    %c0_i32 = arith.constant 0 : i32
    return %arg0, %arg2 : i32, i32
  }
  func.func @transform_1(%arg0: i32, %arg1: i32, %arg2: i32) -> (i32, i32) {
    %c0_i32 = arith.constant 0 : i32
    return %arg2, %arg1 : i32, i32
  }
  func.func @transform_2(%arg0: i32, %arg1: i32, %arg2: i32) -> (i32, i32) {
    %c0_i32 = arith.constant 0 : i32
    %c0_i32_0 = arith.constant 0 : i32
    return %c0_i32, %arg1 : i32, i32
  }
  func.func @transform_3(%arg0: i32, %arg1: i32, %arg2: i32) -> (i32, i32) {
    %c0_i32 = arith.constant 0 : i32
    return %arg0, %arg1 : i32, i32
  }
}

module attributes {stable_mosaic.version = 11 : i64} {
  func.func @kernel(%arg0: i32, %arg1: i32, %arg2: i32, %arg3: memref<128x128xbf16, #tpu.memory_space<vmem>>, %arg4: memref<128x128xbf16, #tpu.memory_space<vmem>>, %arg5: memref<128x128xbf16, #tpu.memory_space<vmem>>, %arg6: memref<128x128xbf16, #tpu.memory_space<vmem>>, %arg7: memref<1x128xf32, #tpu.memory_space<vmem>>, %arg8: memref<128x128xf32, #tpu.memory_space<vmem>>, %arg9: memref<128x128xf32, #tpu.memory_space<vmem>>) attributes {dimension_semantics = [#tpu.dimension_semantics<parallel>, #tpu.dimension_semantics<parallel>, #tpu.dimension_semantics<arbitrary>], iteration_bounds = array<i64: 1, 1, 1>, scalar_prefetch = 0 : i64, scratch_operands = 1 : i64, tpu.core_type = #tpu.core_type<tc>, window_params = [{transform_indices = @transform_0, window_bounds = array<i64: 128, 128>}, {transform_indices = @transform_1, window_bounds = array<i64: 128, 128>}, {transform_indices = @transform_2, window_bounds = array<i64: 128, 128>}, {transform_indices = @transform_3, window_bounds = array<i64: 128, 128>}, {transform_indices = @transform_4, window_bounds = array<i64: 1, 128>}, {transform_indices = @transform_5, window_bounds = array<i64: 128, 128>}]} {
    %c0_i32 = arith.constant 0 : i32
    %0 = arith.cmpi eq, %arg2, %c0_i32 : i32
    %1 = arith.extui %0 : i1 to i32
    %c0_i32_0 = arith.constant 0 : i32
    %2 = arith.cmpi ne, %1, %c0_i32_0 : i32
    scf.if %2 {
      %cst_15 = arith.constant 0.000000e+00 : f32
      %16 = vector.broadcast %cst_15 : f32 to vector<128x128xf32>
      %c0_16 = arith.constant 0 : index
      %c0_17 = arith.constant 0 : index
      %17 = vector.load %arg9[%c0_16, %c0_17] : memref<128x128xf32, #tpu.memory_space<vmem>>, vector<128x128xf32>
      tpu.vector_store %arg9[%c0_16, %c0_17], %16 {strides = array<i32>} : memref<128x128xf32, #tpu.memory_space<vmem>>, vector<128x128xf32>,
    } else {
    }
    %c0 = arith.constant 0 : index
    %c0_1 = arith.constant 0 : index
    %3 = vector.load %arg9[%c0, %c0_1] : memref<128x128xf32, #tpu.memory_space<vmem>>, vector<128x128xf32>
    %c0_2 = arith.constant 0 : index
    %c0_3 = arith.constant 0 : index
    %4 = vector.load %arg3[%c0_2, %c0_3] : memref<128x128xbf16, #tpu.memory_space<vmem>>, vector<128x128xbf16>
    %c0_4 = arith.constant 0 : index
    %c0_5 = arith.constant 0 : index
    %5 = vector.load %arg5[%c0_4, %c0_5] : memref<128x128xbf16, #tpu.memory_space<vmem>>, vector<128x128xbf16>
    %cst = arith.constant dense<0.000000e+00> : vector<128x128xf32>
    %6 = tpu.matmul %4, %5, %cst {dimension_numbers = #tpu.dot_dimension_numbers<[1], [0], [0], [1], [0, 0, 1, 1], [], []>} : vector<128x128xbf16>, vector<128x128xbf16>, vector<128x128xf32> -> vector<128x128xf32>
    %7 = arith.addf %3, %6 : vector<128x128xf32>
    %c0_6 = arith.constant 0 : index
    %c0_7 = arith.constant 0 : index
    %8 = vector.load %arg4[%c0_6, %c0_7] : memref<128x128xbf16, #tpu.memory_space<vmem>>, vector<128x128xbf16>
    %c0_8 = arith.constant 0 : index
    %c0_9 = arith.constant 0 : index
    %9 = vector.load %arg6[%c0_8, %c0_9] : memref<128x128xbf16, #tpu.memory_space<vmem>>, vector<128x128xbf16>
    %cst_10 = arith.constant dense<0.000000e+00> : vector<128x128xf32>
    %10 = tpu.matmul %8, %9, %cst_10 {dimension_numbers = #tpu.dot_dimension_numbers<[1], [0], [0], [1], [0, 0, 1, 1], [], []>} : vector<128x128xbf16>, vector<128x128xbf16>, vector<128x128xf32> -> vector<128x128xf32>
    %11 = arith.addf %7, %10 : vector<128x128xf32>
    %c0_11 = arith.constant 0 : index
    %c0_12 = arith.constant 0 : index
    %12 = vector.load %arg9[%c0_11, %c0_12] : memref<128x128xf32, #tpu.memory_space<vmem>>, vector<128x128xf32>
    tpu.vector_store %arg9[%c0_11, %c0_12], %11 {strides = array<i32>} : memref<128x128xf32, #tpu.memory_space<vmem>>, vector<128x128xf32>,
    %c0_i32_13 = arith.constant 0 : i32
    %13 = arith.cmpi eq, %arg2, %c0_i32_13 : i32
    %14 = arith.extui %13 : i1 to i32
    %c0_i32_14 = arith.constant 0 : i32
    %15 = arith.cmpi ne, %14, %c0_i32_14 : i32
    scf.if %15 {
      %c0_15 = arith.constant 0 : index
      %c0_16 = arith.constant 0 : index
      %16 = vector.load %arg9[%c0_15, %c0_16] : memref<128x128xf32, #tpu.memory_space<vmem>>, vector<128x128xf32>
      %c0_17 = arith.constant 0 : index
      %c0_18 = arith.constant 0 : index
      %17 = vector.load %arg7[%c0_17, %c0_18] : memref<1x128xf32, #tpu.memory_space<vmem>>, vector<1x128xf32>
      %18 = vector.broadcast %17 : vector<1x128xf32> to vector<128x128xf32>
      %19 = arith.addf %16, %18 : vector<128x128xf32>
      %cst_19 = arith.constant 2.000000e-01 : f32
      %20 = vector.broadcast %cst_19 : f32 to vector<128x128xf32>
      %21 = arith.mulf %20, %19 : vector<128x128xf32>
      %22 = arith.maximumf %19, %21 : vector<128x128xf32>
      %c0_20 = arith.constant 0 : index
      %c0_21 = arith.constant 0 : index
      %23 = vector.load %arg8[%c0_20, %c0_21] : memref<128x128xf32, #tpu.memory_space<vmem>>, vector<128x128xf32>
      tpu.vector_store %arg8[%c0_20, %c0_21], %22 {strides = array<i32>} : memref<128x128xf32, #tpu.memory_space<vmem>>, vector<128x128xf32>,
    } else {
    }
    return
  }
  func.func @transform_0(%arg0: i32, %arg1: i32, %arg2: i32) -> (i32, i32) {
    %c0_i32 = arith.constant 0 : i32
    return %arg0, %arg2 : i32, i32
  }
  func.func @transform_1(%arg0: i32, %arg1: i32, %arg2: i32) -> (i32, i32) {
    %c0_i32 = arith.constant 0 : i32
    return %arg0, %arg2 : i32, i32
  }
  func.func @transform_2(%arg0: i32, %arg1: i32, %arg2: i32) -> (i32, i32) {
    %c0_i32 = arith.constant 0 : i32
    return %arg2, %arg1 : i32, i32
  }
  func.func @transform_3(%arg0: i32, %arg1: i32, %arg2: i32) -> (i32, i32) {
    %c0_i32 = arith.constant 0 : i32
    return %arg2, %arg1 : i32, i32
  }
  func.func @transform_4(%arg0: i32, %arg1: i32, %arg2: i32) -> (i32, i32) {
    %c0_i32 = arith.constant 0 : i32
    %c0_i32_0 = arith.constant 0 : i32
    return %c0_i32, %arg1 : i32, i32
  }
  func.func @transform_5(%arg0: i32, %arg1: i32, %arg2: i32) -> (i32, i32) {
    %c0_i32 = arith.constant 0 : i32
    return %arg0, %arg1 : i32, i32
  }
}

</mosaic_0001>

<llo_original>
// kernel: resblock_down_forward.2
$region0: #{resblock_down_forward.2}
  #allocation0 [shape = 'u32[]', space=smem, size = 0x4, offset = 0x4, fixed_abs, tag = 'smem constant byte address 0x4 - core index']
  #allocation1 [shape = 'u32[144,128]{1,0:T(1,128)}', space=vmem, size = 0x12000, scoped, tag = 'internal scratch']
  #allocation2 [shape = 'f32[128,128]{1,0:T(8,128)}', space=vmem, size = 0x10000, scoped, tag = 'scratch operand']
  %s0 = inlined_call_operand.vmem [shape: bf16[512,128], index: 0, kind: input, shape index: {}]
  %s1 = inlined_call_operand.vmem [shape: bf16[128,128], index: 1, kind: input, shape index: {}]
  %s2 = inlined_call_operand.vmem [shape: f32[1,128], index: 2, kind: input, shape index: {}]
  %s3 = inlined_call_operand.vmem [shape: bf16[512,128], index: 3, kind: output, shape index: {}]
  %s4 = sld [smem:[#allocation0]]
  $region53: #{resblock_down_forward.2} parent=0
    _
  %s6 = ssub.s32 1, %s4
  %s7 = scalar_select 0, %s6, %s4
  loop: start=0, step=1, limit=6
  $region2: #{resblock_down_forward.2} parent=0 // loop_pre_header
    _
  $region3: #{resblock_down_forward.2} parent=0 // loop_header
    %s9 = sphi 0, %s13
    %p10 = scmp.ge.s32.totalorder %s9, 6
    %s16 = sphi 0, %s35
    %s17 = sphi 0, %s31
    %s18 = sphi 0, %s27
    %s19 = sphi 0, %s16
    %s20 = sphi 0, %s17
    %s21 = sphi 0, %s18
    %s22 = sphi 0, %s19
    %s23 = sphi 0, %s20
    %s24 = sphi 0, %s21
    %s40 = sphi 0, %s42
    %s43 = sphi 0, %s40
    %s44 = sphi 0, %s43
    %s60 = sphi 0, %s44
    %s68 = sphi 0, %s70
    %s71 = sphi 0, %s68
    %s72 = sphi 0, %s71
    %s88 = sphi 0, %s72
    %s94 = sphi 0, %s96
    %s97 = sphi 0, %s94
    %s98 = sphi 0, %s97
    %s114 = sphi 0, %s98
    %s122 = sphi 0, %s124
    %s125 = sphi 0, %s122
    %s126 = sphi 0, %s125
    %s142 = sphi 0, %s126
  $region4: #{resblock_down_forward.2} parent=0 // loop_header_branch
    %12 = sbr.rel (%p10) target = $region8
  $region5: #{resblock_down_forward.2} parent=0 // loop_body
    %s14 = ssub.s32 %s9, 1
    %s15 = ssub.s32 %s9, 2
    %s25 = sadd.s32 1, %s18
    %p26 = scmp.ge.s32.totalorder %s25, 1
    %s27 = scalar_select %p26, 0, %s25
    %s28 = sadd.s32 1, %s17
    %s29 = scalar_select %p26, %s28, %s17
    %p30 = scmp.ge.s32.totalorder %s29, 1
    %s31 = scalar_select %p30, 0, %s29
    %s32 = sadd.s32 1, %s16
    %s33 = scalar_select %p30, %s32, %s16
    %p34 = scmp.ge.s32.totalorder %s33, 4
    %s35 = scalar_select %p34, 0, %s33
    %s36 = ssub.s32 %s16, %s35
    %s37 = ssub.s32 %s18, %s27
    %s38 = sor.u32 %s36, %s37
    %p39 = scmp.eq.s32.totalorder %s38, 0
    %s41 = sadd.s32 %s40, 1
    %s42 = scalar_select %p39, %s40, %s41
    %p45 = pneg %p39
    %p46 = scmp.eq.s32.totalorder %s9, 3
    %p47 = por %p45, %p46
    %p48 = scmp.ne.s32.totalorder %s40, %s43
    %p49 = scmp.eq.s32.totalorder %s9, 0
    %p50 = por %p48, %p49
    %p51 = scmp.ne.s32.totalorder %s40, %s43
    %p52 = scmp.eq.s32.totalorder %s14, 3
    %p53 = por %p51, %p52
    %p54 = scmp.ne.s32.totalorder %s43, %s44
    %p55 = scmp.eq.s32.totalorder %s14, 0
    %p56 = por %p54, %p55
    %p57 = scmp.ne.s32.totalorder %s43, %s44
    %p58 = scmp.eq.s32.totalorder %s15, 3
    %p59 = por %p57, %p58
    %p61 = scmp.ne.s32.totalorder %s44, %s60
    %p62 = scmp.eq.s32.totalorder %s15, 0
    %p63 = por %p61, %p62
    %s64 = ssub.s32 %s18, %s27
    %s65 = ssub.s32 %s17, %s31
    %s66 = sor.u32 %s64, %s65
    %p67 = scmp.eq.s32.totalorder %s66, 0
    %s69 = sadd.s32 %s68, 1
    %s70 = scalar_select %p67, %s68, %s69
    %p73 = pneg %p67
    %p74 = scmp.eq.s32.totalorder %s9, 3
    %p75 = por %p73, %p74
    %p76 = scmp.ne.s32.totalorder %s68, %s71
    %p77 = scmp.eq.s32.totalorder %s9, 0
    %p78 = por %p76, %p77
    %p79 = scmp.ne.s32.totalorder %s68, %s71
    %p80 = scmp.eq.s32.totalorder %s14, 3
    %p81 = por %p79, %p80
    %p82 = scmp.ne.s32.totalorder %s71, %s72
    %p83 = scmp.eq.s32.totalorder %s14, 0
    %p84 = por %p82, %p83
    %p85 = scmp.ne.s32.totalorder %s71, %s72
    %p86 = scmp.eq.s32.totalorder %s15, 3
    %p87 = por %p85, %p86
    %p89 = scmp.ne.s32.totalorder %s72, %s88
    %p90 = scmp.eq.s32.totalorder %s15, 0
    %p91 = por %p89, %p90
    %s92 = ssub.s32 %s17, %s31
    %p93 = scmp.eq.s32.totalorder %s92, 0
    %s95 = sadd.s32 %s94, 1
    %s96 = scalar_select %p93, %s94, %s95
    %p99 = pneg %p93
    %p100 = scmp.eq.s32.totalorder %s9, 3
    %p101 = por %p99, %p100
    %p102 = scmp.ne.s32.totalorder %s94, %s97
    %p103 = scmp.eq.s32.totalorder %s9, 0
    %p104 = por %p102, %p103
    %p105 = scmp.ne.s32.totalorder %s94, %s97
    %p106 = scmp.eq.s32.totalorder %s14, 3
    %p107 = por %p105, %p106
    %p108 = scmp.ne.s32.totalorder %s97, %s98
    %p109 = scmp.eq.s32.totalorder %s14, 0
    %p110 = por %p108, %p109
    %p111 = scmp.ne.s32.totalorder %s97, %s98
    %p112 = scmp.eq.s32.totalorder %s15, 3
    %p113 = por %p111, %p112
    %p115 = scmp.ne.s32.totalorder %s98, %s114
    %p116 = scmp.eq.s32.totalorder %s15, 0
    %p117 = por %p115, %p116
    %s118 = ssub.s32 %s16, %s35
    %s119 = ssub.s32 %s17, %s31
    %s120 = sor.u32 %s118, %s119
    %p121 = scmp.eq.s32.totalorder %s120, 0
    %s123 = sadd.s32 %s122, 1
    %s124 = scalar_select %p121, %s122, %s123
    %p127 = pneg %p121
    %p128 = scmp.eq.s32.totalorder %s9, 3
    %p129 = por %p127, %p128
    %p130 = scmp.ne.s32.totalorder %s122, %s125
    %p131 = scmp.eq.s32.totalorder %s9, 0
    %p132 = por %p130, %p131
    %p133 = scmp.ne.s32.totalorder %s122, %s125
    %p134 = scmp.eq.s32.totalorder %s14, 3
    %p135 = por %p133, %p134
    %p136 = scmp.ne.s32.totalorder %s125, %s126
    %p137 = scmp.eq.s32.totalorder %s14, 0
    %p138 = por %p136, %p137
    %p139 = scmp.ne.s32.totalorder %s125, %s126
    %p140 = scmp.eq.s32.totalorder %s15, 3
    %p141 = por %p139, %p140
    %p143 = scmp.ne.s32.totalorder %s126, %s142
    %p144 = scmp.eq.s32.totalorder %s15, 0
    %p145 = por %p143, %p144
    %p146 = scmp.le.s32.totalorder 1, %s9
    %p147 = scmp.lt.s32.totalorder %s9, 5
    %p148 = pnand %p146, %p147
    %p149 = pneg %p148
    // Predicated region
    $region9: #{resblock_down_forward.2} parent=5 // pred_check
      _
    $region10: #{resblock_down_forward.2} parent=5 // pred_check_branch
      %151 = sbr.rel (%p148) target = $region12
    $region11: #{resblock_down_forward.2} parent=5 // pred_region
      %s152 = ssub.s32 %s9, 1
      // Predicated region
      $region13: #{resblock_down_forward.2} parent=11 // pred_check
        %p153 = pneg %p84
      $region14: #{resblock_down_forward.2} parent=11 // pred_check_branch
        %155 = sbr.rel (%p153) target = $region16
      $region15: #{resblock_down_forward.2} parent=11 // pred_region
        %s156 = smul.u32 16, %s21
        %p157 = scmp.lt.s32.totalorder %s156, 15
        %s158 = scalar_select %p157, %s156, 15
        %p159 = scmp.lt.s32.totalorder %s20, 0
        %s160 = scalar_select %p159, %s20, 0
        %s161 = sadd.s32 %s160, %s158
        %s162 = smul.addr %s161, 4
        %s163 = scalar_lea.vmem %s1, %s162
        %s164 = smul.u32 16, %s21
      $region16: #{resblock_down_forward.2} parent=11 // pred_fallthru
        _
      // Predicated region
      $region17: #{resblock_down_forward.2} parent=11 // pred_check
        %p165 = pneg %p110
      $region18: #{resblock_down_forward.2} parent=11 // pred_check_branch
        %167 = sbr.rel (%p165) target = $region20
      $region19: #{resblock_down_forward.2} parent=11 // pred_region
        %p168 = scmp.lt.s32.totalorder %s20, 0
        %s169 = scalar_select %p168, %s20, 0
        %s170 = scalar_lea.vmem %s2, %s169
      $region20: #{resblock_down_forward.2} parent=11 // pred_fallthru
        _
    $region12: #{resblock_down_forward.2} parent=5 // pred_fallthru
      _
    %p171 = scmp.lt.s32.totalorder %s9, 4
    // Predicated region
    $region21: #{resblock_down_forward.2} parent=5 // pred_check
      %p172 = pneg %p171
    $region22: #{resblock_down_forward.2} parent=5 // pred_check_branch
      %174 = sbr.rel (%p172) target = $region24
    $region23: #{resblock_down_forward.2} parent=5 // pred_region
      // Predicated region
      $region25: #{resblock_down_forward.2} parent=23 // pred_check
        %p175 = pneg %p50
      $region26: #{resblock_down_forward.2} parent=23 // pred_check_branch
        %177 = sbr.rel (%p175) target = $region28
      $region27: #{resblock_down_forward.2} parent=23 // pred_region
        %s178 = smul.u32 16, %s16
        %p179 = scmp.lt.s32.totalorder %s178, 63
        %s180 = scalar_select %p179, %s178, 63
        %p181 = scmp.lt.s32.totalorder %s18, 0
        %s182 = scalar_select %p181, %s18, 0
        %s183 = sadd.s32 %s182, %s180
        %s184 = smul.addr %s183, 4
        %s185 = scalar_lea.vmem %s0, %s184
        %s186 = smul.u32 16, %s16
      $region28: #{resblock_down_forward.2} parent=23 // pred_fallthru
        _
    $region24: #{resblock_down_forward.2} parent=5 // pred_fallthru
      _
    %p187 = scmp.le.s32.totalorder 1, %s9
    %p188 = scmp.lt.s32.totalorder %s9, 5
    %p189 = pnand %p187, %p188
    %p190 = pneg %p189
    // Predicated region
    $region29: #{resblock_down_forward.2} parent=5 // pred_check
      _
    $region30: #{resblock_down_forward.2} parent=5 // pred_check_branch
      %192 = sbr.rel (%p189) target = $region32
    $region31: #{resblock_down_forward.2} parent=5 // pred_region
      %s193 = ssub.s32 %s9, 1
      %s194 = smul.u32 16, %s19
      %p195 = scmp.lt.s32.totalorder %s194, 63
      %s196 = scalar_select %p195, %s194, 63
      %p197 = scmp.lt.s32.totalorder %s21, 0
      %s198 = scalar_select %p197, %s21, 0
      %s199 = sadd.s32 %s198, %s196
      %s200 = smul.addr %s199, 4
      %s201 = scalar_lea.vmem %s0, %s200
      %p202 = pneg %p56
      %p203 = pneg %p53
      %s204 = smul.u32 16, %s21
      %p205 = scmp.lt.s32.totalorder %s204, 15
      %s206 = scalar_select %p205, %s204, 15
      %p207 = scmp.lt.s32.totalorder %s20, 0
      %s208 = scalar_select %p207, %s20, 0
      %s209 = sadd.s32 %s208, %s206
      %s210 = smul.addr %s209, 4
      %s211 = scalar_lea.vmem %s1, %s210
      %p212 = pneg %p84
      %p213 = pneg %p81
      %p214 = scmp.lt.s32.totalorder %s20, 0
      %s215 = scalar_select %p214, %s20, 0
      %s216 = scalar_lea.vmem %s2, %s215
      %p217 = pneg %p110
      %p218 = pneg %p107
      %p219 = pneg %p138
      %p220 = pneg %p135
      %s221 = smul.u32 16, %s19
      %p222 = scmp.lt.s32.totalorder %s221, 63
      %s223 = scalar_select %p222, %s221, 63
      %p224 = scmp.lt.s32.totalorder %s20, 0
      %s225 = scalar_select %p224, %s20, 0
      %s226 = sadd.s32 %s225, %s223
      %s227 = smul.addr %s226, 4
      %s228 = scalar_lea.vmem %s3, %s227
      %s229 = smul.u32 16, %s19
      %p230 = scmp.lt.s32.totalorder %s229, 63
      %s231 = scalar_select %p230, %s229, 63
      %p232 = scmp.lt.s32.totalorder %s21, 0
      %s233 = scalar_select %p232, %s21, 0
      %s234 = sadd.s32 %s233, %s231
      %s235 = smul.addr %s234, 4
      %s236 = scalar_lea.vmem %s0, %s235
      %s237 = smul.u32 16, %s19
      %s238 = smul.u32 16, %s21
      %p239 = scmp.lt.s32.totalorder %s238, 15
      %s240 = scalar_select %p239, %s238, 15
      %p241 = scmp.lt.s32.totalorder %s20, 0
      %s242 = scalar_select %p241, %s20, 0
      %s243 = sadd.s32 %s242, %s240
      %s244 = smul.addr %s243, 4
      %s245 = scalar_lea.vmem %s1, %s244
      %s246 = smul.u32 16, %s21
      %p247 = scmp.lt.s32.totalorder %s20, 0
      %s248 = scalar_select %p247, %s20, 0
      %s249 = scalar_lea.vmem %s2, %s248
      %s250 = smul.u32 16, %s19
      %p251 = scmp.lt.s32.totalorder %s250, 63
      %s252 = scalar_select %p251, %s250, 63
      %p253 = scmp.lt.s32.totalorder %s20, 0
      %s254 = scalar_select %p253, %s20, 0
      %s255 = sadd.s32 %s254, %s252
      %s256 = smul.addr %s255, 4
      %s257 = scalar_lea.vmem %s3, %s256
      %s258 = smul.u32 16, %s19
      %p260 = scmp.eq.s32.totalorder %s21, 0
      // Predicated region
      $region33: #{resblock_down_forward.2} parent=31 // pred_check
        %p261 = pneg %p260
      $region34: #{resblock_down_forward.2} parent=31 // pred_check_branch
        %263 = sbr.rel (%p261) target = $region36
      $region35: #{resblock_down_forward.2} parent=31 // pred_region
        %264 = vst [vmem:[#allocation2] sm:$0xff] 0.0
        %265 = vst [vmem:[#allocation2 + $0x8] sm:$0xff] 0.0
        %266 = vst [vmem:[#allocation2 + $0x10] sm:$0xff] 0.0
        %267 = vst [vmem:[#allocation2 + $0x18] sm:$0xff] 0.0
        %268 = vst [vmem:[#allocation2 + $0x20] sm:$0xff] 0.0
        %269 = vst [vmem:[#allocation2 + $0x28] sm:$0xff] 0.0
        %270 = vst [vmem:[#allocation2 + $0x30] sm:$0xff] 0.0
        %271 = vst [vmem:[#allocation2 + $0x38] sm:$0xff] 0.0
        %272 = vst [vmem:[#allocation2 + $0x40] sm:$0xff] 0.0
        %273 = vst [vmem:[#allocation2 + $0x48] sm:$0xff] 0.0
        %274 = vst [vmem:[#allocation2 + $0x50] sm:$0xff] 0.0
        %275 = vst [vmem:[#allocation2 + $0x58] sm:$0xff] 0.0
        %276 = vst [vmem:[#allocation2 + $0x60] sm:$0xff] 0.0
        %277 = vst [vmem:[#allocation2 + $0x68] sm:$0xff] 0.0
        %278 = vst [vmem:[#allocation2 + $0x70] sm:$0xff] 0.0
        %279 = vst [vmem:[#allocation2 + $0x78] sm:$0xff] 0.0
      $region36: #{resblock_down_forward.2} parent=31 // pred_fallthru
        _
      %v280 = vld [vmem:[#allocation2] sm:$0xff]
      %v281 = vld [vmem:[#allocation2 + $0x8] sm:$0xff]
      %v282 = vld [vmem:[#allocation2 + $0x10] sm:$0xff]
      %v283 = vld [vmem:[#allocation2 + $0x18] sm:$0xff]
      %v284 = vld [vmem:[#allocation2 + $0x20] sm:$0xff]
      %v285 = vld [vmem:[#allocation2 + $0x28] sm:$0xff]
      %v286 = vld [vmem:[#allocation2 + $0x30] sm:$0xff]
      %v287 = vld [vmem:[#allocation2 + $0x38] sm:$0xff]
      %v288 = vld [vmem:[#allocation2 + $0x40] sm:$0xff]
      %v289 = vld [vmem:[#allocation2 + $0x48] sm:$0xff]
      %v290 = vld [vmem:[#allocation2 + $0x50] sm:$0xff]
      %v291 = vld [vmem:[#allocation2 + $0x58] sm:$0xff]
      %v292 = vld [vmem:[#allocation2 + $0x60] sm:$0xff]
      %v293 = vld [vmem:[#allocation2 + $0x68] sm:$0xff]
      %v294 = vld [vmem:[#allocation2 + $0x70] sm:$0xff]
      %v295 = vld [vmem:[#allocation2 + $0x78] sm:$0xff]
      %v296 = vld [vmem:[%s236] sm:$0xf]
      %v297 = vld [vmem:[%s236 + $0x4] sm:$0xf]
      %v298 = vld [vmem:[%s236 + $0x8] sm:$0xf]
      %v299 = vld [vmem:[%s236 + $0xc] sm:$0xf]
      %v300 = vld [vmem:[%s236 + $0x10] sm:$0xf]
      %v301 = vld [vmem:[%s236 + $0x14] sm:$0xf]
      %v302 = vld [vmem:[%s236 + $0x18] sm:$0xf]
      %v303 = vld [vmem:[%s236 + $0x1c] sm:$0xf]
      %v304 = vld [vmem:[%s236 + $0x20] sm:$0xf]
      %v305 = vld [vmem:[%s236 + $0x24] sm:$0xf]
      %v306 = vld [vmem:[%s236 + $0x28] sm:$0xf]
      %v307 = vld [vmem:[%s236 + $0x2c] sm:$0xf]
      %v308 = vld [vmem:[%s236 + $0x30] sm:$0xf]
      %v309 = vld [vmem:[%s236 + $0x34] sm:$0xf]
      %v310 = vld [vmem:[%s236 + $0x38] sm:$0xf]
      %v311 = vld [vmem:[%s236 + $0x3c] sm:$0xf]
      %v312 = vld [vmem:[%s245] sm:$0xf]
      %v313 = vld [vmem:[%s245 + $0x4] sm:$0xf]
      %v314 = vld [vmem:[%s245 + $0x8] sm:$0xf]
      %v315 = vld [vmem:[%s245 + $0xc] sm:$0xf]
      %v316 = vld [vmem:[%s245 + $0x10] sm:$0xf]
      %v317 = vld [vmem:[%s245 + $0x14] sm:$0xf]
      %v318 = vld [vmem:[%s245 + $0x18] sm:$0xf]
      %v319 = vld [vmem:[%s245 + $0x1c] sm:$0xf]
      %v320 = vld [vmem:[%s245 + $0x20] sm:$0xf]
      %v321 = vld [vmem:[%s245 + $0x24] sm:$0xf]
      %v322 = vld [vmem:[%s245 + $0x28] sm:$0xf]
      %v323 = vld [vmem:[%s245 + $0x2c] sm:$0xf]
      %v324 = vld [vmem:[%s245 + $0x30] sm:$0xf]
      %v325 = vld [vmem:[%s245 + $0x34] sm:$0xf]
      %v326 = vld [vmem:[%s245 + $0x38] sm:$0xf]
      %v327 = vld [vmem:[%s245 + $0x3c] sm:$0xf]
      %v344 = vunpack.c.l.b16 %v296
      %v345 = vunpack.c.l.b16 %v297
      %v346 = vunpack.c.l.b16 %v298
      %v347 = vunpack.c.l.b16 %v299
      %v348 = vunpack.c.l.b16 %v300
      %v349 = vunpack.c.l.b16 %v301
      %v350 = vunpack.c.l.b16 %v302
      %v351 = vunpack.c.l.b16 %v303
      %v352 = vunpack.c.l.b16 %v304
      %v353 = vunpack.c.l.b16 %v305
      %v354 = vunpack.c.l.b16 %v306
      %v355 = vunpack.c.l.b16 %v307
      %v356 = vunpack.c.l.b16 %v308
      %v357 = vunpack.c.l.b16 %v309
      %v358 = vunpack.c.l.b16 %v310
      %v359 = vunpack.c.l.b16 %v311
      %v360 = vpack.c.b16 %v345, %v344
      %v361 = vpack.c.b16 %v347, %v346
      %v362 = vpack.c.b16 %v349, %v348
      %v363 = vpack.c.b16 %v351, %v350
      %v364 = vpack.c.b16 %v353, %v352
      %v365 = vpack.c.b16 %v355, %v354
      %v366 = vpack.c.b16 %v357, %v356
      %v367 = vpack.c.b16 %v359, %v358
      %v392 = vunpack.c.l.b16 %v312
      %v393 = vunpack.c.l.b16 %v313
      %v394 = vunpack.c.l.b16 %v314
      %v395 = vunpack.c.l.b16 %v315
      %v396 = vunpack.c.l.b16 %v316
      %v397 = vunpack.c.l.b16 %v317
      %v398 = vunpack.c.l.b16 %v318
      %v399 = vunpack.c.l.b16 %v319
      %v400 = vunpack.c.l.b16 %v320
      %v401 = vunpack.c.l.b16 %v321
      %v402 = vunpack.c.l.b16 %v322
      %v403 = vunpack.c.l.b16 %v323
      %v404 = vunpack.c.l.b16 %v324
      %v405 = vunpack.c.l.b16 %v325
      %v406 = vunpack.c.l.b16 %v326
      %v407 = vunpack.c.l.b16 %v327
      %v408 = vpack.c.b16 %v393, %v392
      %v409 = vpack.c.b16 %v395, %v394
      %v410 = vpack.c.b16 %v397, %v396
      %v411 = vpack.c.b16 %v399, %v398
      %v412 = vpack.c.b16 %v401, %v400
      %v413 = vpack.c.b16 %v403, %v402
      %v414 = vpack.c.b16 %v405, %v404
      %v415 = vpack.c.b16 %v407, %v406
      %424 = vmatprep.subr.bf16.mxu0 0
      %425 = vmatpush1.bf16.msra.mxu0 %v408
      %426 = vmatprep.subr.bf16.mxu0 0
      %427 = vmatpush1.bf16.msra.mxu0 %v409
      %428 = vmatprep.subr.bf16.mxu0 0
      %429 = vmatpush1.bf16.msra.mxu0 %v410
      %430 = vmatprep.subr.bf16.mxu0 0
      %431 = vmatpush1.bf16.msra.mxu0 %v411
      %432 = vmatprep.subr.bf16.mxu0 0
      %433 = vmatpush1.bf16.msra.mxu0 %v412
      %434 = vmatprep.subr.bf16.mxu0 0
      %435 = vmatpush1.bf16.msra.mxu0 %v413
      %436 = vmatprep.subr.bf16.mxu0 0
      %437 = vmatpush1.bf16.msra.mxu0 %v414
      %438 = vmatprep.subr.bf16.mxu0 0
      %439 = vmatpush1.bf16.msra.mxu0 %v415
      %440 = vmatprep.subr.bf16.mxu0 0
      %441 = vmatpush1.bf16.msra.mxu0 0
      %442 = vmatprep.subr.bf16.mxu0 0
      %443 = vmatpush1.bf16.msra.mxu0 0
      %444 = vmatprep.subr.bf16.mxu0 0
      %445 = vmatpush1.bf16.msra.mxu0 0
      %446 = vmatprep.subr.bf16.mxu0 0
      %447 = vmatpush1.bf16.msra.mxu0 0
      %448 = vmatprep.subr.bf16.mxu0 0
      %449 = vmatpush1.bf16.msra.mxu0 0
      %450 = vmatprep.subr.bf16.mxu0 0
      %451 = vmatpush1.bf16.msra.mxu0 0
      %452 = vmatprep.subr.bf16.mxu0 0
      %453 = vmatpush1.bf16.msra.mxu0 0
      %454 = vmatprep.subr.bf16.mxu0 0
      %455 = vmatpush1.bf16.msra.mxu0 0
      %456 = vmatprep.mubr.bf16.mxu0 0
      %457 = vmatmul.mubr.bf16.gmra.mrb[0].mxu0 %v360
      %v458 = vpop.f32.mrb[0].mxu0
      %v459 = vadd.f32 0.0, %v458
      %v460 = vpop.f32.mrb[0].mxu0
      %v461 = vpop.f32.mrb[0].mxu0
      %v462 = vadd.f32 0.0, %v461
      %v463 = vpop.f32.mrb[0].mxu0
      %464 = vmatprep.mubr.bf16.mxu0 0
      %465 = vmatmul.mubr.bf16.gmra.mrb[0].mxu0 %v361
      %v466 = vpop.f32.mrb[0].mxu0
      %v467 = vadd.f32 0.0, %v466
      %v468 = vpop.f32.mrb[0].mxu0
      %v469 = vpop.f32.mrb[0].mxu0
      %v470 = vadd.f32 0.0, %v469
      %v471 = vpop.f32.mrb[0].mxu0
      %472 = vmatprep.mubr.bf16.mxu0 0
      %473 = vmatmul.mubr.bf16.gmra.mrb[0].mxu0 %v362
      %v474 = vpop.f32.mrb[0].mxu0
      %v475 = vadd.f32 0.0, %v474
      %v476 = vpop.f32.mrb[0].mxu0
      %v477 = vpop.f32.mrb[0].mxu0
      %v478 = vadd.f32 0.0, %v477
      %v479 = vpop.f32.mrb[0].mxu0
      %480 = vmatprep.mubr.bf16.mxu0 0
      %481 = vmatmul.mubr.bf16.gmra.mrb[0].mxu0 %v363
      %v482 = vpop.f32.mrb[0].mxu0
      %v483 = vadd.f32 0.0, %v482
      %v484 = vpop.f32.mrb[0].mxu0
      %v485 = vpop.f32.mrb[0].mxu0
      %v486 = vadd.f32 0.0, %v485
      %v487 = vpop.f32.mrb[0].mxu0
      %488 = vmatprep.mubr.bf16.mxu0 0
      %489 = vmatmul.mubr.bf16.gmra.mrb[0].mxu0 %v364
      %v490 = vpop.f32.mrb[0].mxu0
      %v491 = vadd.f32 0.0, %v490
      %v492 = vpop.f32.mrb[0].mxu0
      %v493 = vpop.f32.mrb[0].mxu0
      %v494 = vadd.f32 0.0, %v493
      %v495 = vpop.f32.mrb[0].mxu0
      %496 = vmatprep.mubr.bf16.mxu0 0
      %497 = vmatmul.mubr.bf16.gmra.mrb[0].mxu0 %v365
      %v498 = vpop.f32.mrb[0].mxu0
      %v499 = vadd.f32 0.0, %v498
      %v500 = vpop.f32.mrb[0].mxu0
      %v501 = vpop.f32.mrb[0].mxu0
      %v502 = vadd.f32 0.0, %v501
      %v503 = vpop.f32.mrb[0].mxu0
      %504 = vmatprep.mubr.bf16.mxu0 0
      %505 = vmatmul.mubr.bf16.gmra.mrb[0].mxu0 %v366
      %v506 = vpop.f32.mrb[0].mxu0
      %v507 = vadd.f32 0.0, %v506
      %v508 = vpop.f32.mrb[0].mxu0
      %v509 = vpop.f32.mrb[0].mxu0
      %v510 = vadd.f32 0.0, %v509
      %v511 = vpop.f32.mrb[0].mxu0
      %512 = vmatprep.mubr.bf16.mxu0 0
      %513 = vmatmul.mubr.bf16.gmra.mrb[0].mxu0 %v367
      %v514 = vpop.f32.mrb[0].mxu0
      %v515 = vadd.f32 0.0, %v514
      %v516 = vpop.f32.mrb[0].mxu0
      %v517 = vpop.f32.mrb[0].mxu0
      %v518 = vadd.f32 0.0, %v517
      %v519 = vpop.f32.mrb[0].mxu0
      %520 = vdwg.mxu0
      %v521 = vadd.f32 %v280, %v459
      %v522 = vadd.f32 %v281, %v462
      %v523 = vadd.f32 %v282, %v467
      %v524 = vadd.f32 %v283, %v470
      %v525 = vadd.f32 %v284, %v475
      %v526 = vadd.f32 %v285, %v478
      %v527 = vadd.f32 %v286, %v483
      %v528 = vadd.f32 %v287, %v486
      %v529 = vadd.f32 %v288, %v491
      %v530 = vadd.f32 %v289, %v494
      %v531 = vadd.f32 %v290, %v499
      %v532 = vadd.f32 %v291, %v502
      %v533 = vadd.f32 %v292, %v507
      %v534 = vadd.f32 %v293, %v510
      %v535 = vadd.f32 %v294, %v515
      %v536 = vadd.f32 %v295, %v518
      %537 = vst [vmem:[#allocation2] sm:$0xff] %v521
      %538 = vst [vmem:[#allocation2 + $0x8] sm:$0xff] %v522
      %539 = vst [vmem:[#allocation2 + $0x10] sm:$0xff] %v523
      %540 = vst [vmem:[#allocation2 + $0x18] sm:$0xff] %v524
      %541 = vst [vmem:[#allocation2 + $0x20] sm:$0xff] %v525
      %542 = vst [vmem:[#allocation2 + $0x28] sm:$0xff] %v526
      %543 = vst [vmem:[#allocation2 + $0x30] sm:$0xff] %v527
      %544 = vst [vmem:[#allocation2 + $0x38] sm:$0xff] %v528
      %545 = vst [vmem:[#allocation2 + $0x40] sm:$0xff] %v529
      %546 = vst [vmem:[#allocation2 + $0x48] sm:$0xff] %v530
      %547 = vst [vmem:[#allocation2 + $0x50] sm:$0xff] %v531
      %548 = vst [vmem:[#allocation2 + $0x58] sm:$0xff] %v532
      %549 = vst [vmem:[#allocation2 + $0x60] sm:$0xff] %v533
      %550 = vst [vmem:[#allocation2 + $0x68] sm:$0xff] %v534
      %551 = vst [vmem:[#allocation2 + $0x70] sm:$0xff] %v535
      %552 = vst [vmem:[#allocation2 + $0x78] sm:$0xff] %v536
      // Predicated region
      $region37: #{resblock_down_forward.2} parent=31 // pred_check
        %p553 = pneg %p260
      $region38: #{resblock_down_forward.2} parent=31 // pred_check_branch
        %555 = sbr.rel (%p553) target = $region40
      $region39: #{resblock_down_forward.2} parent=31 // pred_region
        %v556 = vld [vmem:[#allocation2] sm:$0xff]
        %v557 = vld [vmem:[#allocation2 + $0x8] sm:$0xff]
        %v558 = vld [vmem:[#allocation2 + $0x10] sm:$0xff]
        %v559 = vld [vmem:[#allocation2 + $0x18] sm:$0xff]
        %v560 = vld [vmem:[#allocation2 + $0x20] sm:$0xff]
        %v561 = vld [vmem:[#allocation2 + $0x28] sm:$0xff]
        %v562 = vld [vmem:[#allocation2 + $0x30] sm:$0xff]
        %v563 = vld [vmem:[#allocation2 + $0x38] sm:$0xff]
        %v564 = vld [vmem:[#allocation2 + $0x40] sm:$0xff]
        %v565 = vld [vmem:[#allocation2 + $0x48] sm:$0xff]
        %v566 = vld [vmem:[#allocation2 + $0x50] sm:$0xff]
        %v567 = vld [vmem:[#allocation2 + $0x58] sm:$0xff]
        %v568 = vld [vmem:[#allocation2 + $0x60] sm:$0xff]
        %v569 = vld [vmem:[#allocation2 + $0x68] sm:$0xff]
        %v570 = vld [vmem:[#allocation2 + $0x70] sm:$0xff]
        %v571 = vld [vmem:[#allocation2 + $0x78] sm:$0xff]
        %v572 = vld [vmem:[%s249] sm:$0x1]
        %v574 = vlaneseq
        %v575 = vshrl.u32 %v574, 7
        %v576 = vsub.s32 0, %v575
        %v577 = vrot.slane %v572, %v576
        %v579 = vadd.f32 %v556, %v577
        %v580 = vadd.f32 %v557, %v577
        %v581 = vadd.f32 %v558, %v577
        %v582 = vadd.f32 %v559, %v577
        %v583 = vadd.f32 %v560, %v577
        %v584 = vadd.f32 %v561, %v577
        %v585 = vadd.f32 %v562, %v577
        %v586 = vadd.f32 %v563, %v577
        %v587 = vadd.f32 %v564, %v577
        %v588 = vadd.f32 %v565, %v577
        %v589 = vadd.f32 %v566, %v577
        %v590 = vadd.f32 %v567, %v577
        %v591 = vadd.f32 %v568, %v577
        %v592 = vadd.f32 %v569, %v577
        %v593 = vadd.f32 %v570, %v577
        %v594 = vadd.f32 %v571, %v577
        %v595 = vmul.f32 %v579, 0.2
        %v596 = vmul.f32 %v580, 0.2
        %v597 = vmul.f32 %v581, 0.2
        %v598 = vmul.f32 %v582, 0.2
        %v599 = vmul.f32 %v583, 0.2
        %v600 = vmul.f32 %v584, 0.2
        %v601 = vmul.f32 %v585, 0.2
        %v602 = vmul.f32 %v586, 0.2
        %v603 = vmul.f32 %v587, 0.2
        %v604 = vmul.f32 %v588, 0.2
        %v605 = vmul.f32 %v589, 0.2
        %v606 = vmul.f32 %v590, 0.2
        %v607 = vmul.f32 %v591, 0.2
        %v608 = vmul.f32 %v592, 0.2
        %v609 = vmul.f32 %v593, 0.2
        %v610 = vmul.f32 %v594, 0.2
        %v611 = vmax.f32 %v579, %v595
        %v612 = vmax.f32 %v580, %v596
        %v613 = vmax.f32 %v581, %v597
        %v614 = vmax.f32 %v582, %v598
        %v615 = vmax.f32 %v583, %v599
        %v616 = vmax.f32 %v584, %v600
        %v617 = vmax.f32 %v585, %v601
        %v618 = vmax.f32 %v586, %v602
        %v619 = vmax.f32 %v587, %v603
        %v620 = vmax.f32 %v588, %v604
        %v621 = vmax.f32 %v589, %v605
        %v622 = vmax.f32 %v590, %v606
        %v623 = vmax.f32 %v591, %v607
        %v624 = vmax.f32 %v592, %v608
        %v625 = vmax.f32 %v593, %v609
        %v626 = vmax.f32 %v594, %v610
        %v627 = vpack.c.bf16 %v612, %v611
        %v628 = vpack.c.bf16 %v614, %v613
        %v629 = vpack.c.bf16 %v616, %v615
        %v630 = vpack.c.bf16 %v618, %v617
        %v631 = vpack.c.bf16 %v620, %v619
        %v632 = vpack.c.bf16 %v622, %v621
        %v633 = vpack.c.bf16 %v624, %v623
        %v634 = vpack.c.bf16 %v626, %v625
        %v643 = vunpack.c.l.b16 %v627
        %v644 = vunpack.c.h.b16 %v627
        %v645 = vunpack.c.l.b16 %v628
        %v646 = vunpack.c.h.b16 %v628
        %v647 = vunpack.c.l.b16 %v629
        %v648 = vunpack.c.h.b16 %v629
        %v649 = vunpack.c.l.b16 %v630
        %v650 = vunpack.c.h.b16 %v630
        %v651 = vunpack.c.l.b16 %v631
        %v652 = vunpack.c.h.b16 %v631
        %v653 = vunpack.c.l.b16 %v632
        %v654 = vunpack.c.h.b16 %v632
        %v655 = vunpack.c.l.b16 %v633
        %v656 = vunpack.c.h.b16 %v633
        %v657 = vunpack.c.l.b16 %v634
        %v658 = vunpack.c.h.b16 %v634
        %v659 = vpack.c.b16 %v643, %v643
        %v660 = vpack.c.b16 %v644, %v644
        %v661 = vpack.c.b16 %v645, %v645
        %v662 = vpack.c.b16 %v646, %v646
        %v663 = vpack.c.b16 %v647, %v647
        %v664 = vpack.c.b16 %v648, %v648
        %v665 = vpack.c.b16 %v649, %v649
        %v666 = vpack.c.b16 %v650, %v650
        %v667 = vpack.c.b16 %v651, %v651
        %v668 = vpack.c.b16 %v652, %v652
        %v669 = vpack.c.b16 %v653, %v653
        %v670 = vpack.c.b16 %v654, %v654
        %v671 = vpack.c.b16 %v655, %v655
        %v672 = vpack.c.b16 %v656, %v656
        %v673 = vpack.c.b16 %v657, %v657
        %v674 = vpack.c.b16 %v658, %v658
        %691 = vst [vmem:[%s257] sm:$0xf] %v659
        %692 = vst [vmem:[%s257 + $0x4] sm:$0xf] %v660
        %693 = vst [vmem:[%s257 + $0x8] sm:$0xf] %v661
        %694 = vst [vmem:[%s257 + $0xc] sm:$0xf] %v662
        %695 = vst [vmem:[%s257 + $0x10] sm:$0xf] %v663
        %696 = vst [vmem:[%s257 + $0x14] sm:$0xf] %v664
        %697 = vst [vmem:[%s257 + $0x18] sm:$0xf] %v665
        %698 = vst [vmem:[%s257 + $0x1c] sm:$0xf] %v666
        %699 = vst [vmem:[%s257 + $0x20] sm:$0xf] %v667
        %700 = vst [vmem:[%s257 + $0x24] sm:$0xf] %v668
        %701 = vst [vmem:[%s257 + $0x28] sm:$0xf] %v669
        %702 = vst [vmem:[%s257 + $0x2c] sm:$0xf] %v670
        %703 = vst [vmem:[%s257 + $0x30] sm:$0xf] %v671
        %704 = vst [vmem:[%s257 + $0x34] sm:$0xf] %v672
        %705 = vst [vmem:[%s257 + $0x38] sm:$0xf] %v673
        %706 = vst [vmem:[%s257 + $0x3c] sm:$0xf] %v674
      $region40: #{resblock_down_forward.2} parent=31 // pred_fallthru
        _
      %s707 = smul.u32 16, %s19
      %p708 = scmp.lt.s32.totalorder %s707, 63
      %s709 = scalar_select %p708, %s707, 63
      %p710 = scmp.lt.s32.totalorder %s20, 0
      %s711 = scalar_select %p710, %s20, 0
      %s712 = sadd.s32 %s711, %s709
      %s713 = smul.addr %s712, 4
      %s714 = scalar_lea.vmem %s3, %s713
      // Predicated region
      $region41: #{resblock_down_forward.2} parent=31 // pred_check
        %p715 = pneg %p135
      $region42: #{resblock_down_forward.2} parent=31 // pred_check_branch
        %717 = sbr.rel (%p715) target = $region44
      $region43: #{resblock_down_forward.2} parent=31 // pred_region
        %s718 = smul.u32 16, %s19
      $region44: #{resblock_down_forward.2} parent=31 // pred_fallthru
        _
    $region32: #{resblock_down_forward.2} parent=5 // pred_fallthru
      _
    %p719 = scmp.le.s32.totalorder 2, %s9
    // Predicated region
    $region45: #{resblock_down_forward.2} parent=5 // pred_check
      %p720 = pneg %p719
    $region46: #{resblock_down_forward.2} parent=5 // pred_check_branch
      %722 = sbr.rel (%p720) target = $region48
    $region47: #{resblock_down_forward.2} parent=5 // pred_region
      %s723 = ssub.s32 %s9, 2
      // Predicated region
      $region49: #{resblock_down_forward.2} parent=47 // pred_check
        %p724 = pneg %p141
      $region50: #{resblock_down_forward.2} parent=47 // pred_check_branch
        %726 = sbr.rel (%p724) target = $region52
      $region51: #{resblock_down_forward.2} parent=47 // pred_region
        %s727 = smul.u32 16, %s22
        %p728 = scmp.lt.s32.totalorder %s727, 63
        %s729 = scalar_select %p728, %s727, 63
        %p730 = scmp.lt.s32.totalorder %s23, 0
        %s731 = scalar_select %p730, %s23, 0
        %s732 = sadd.s32 %s731, %s729
        %s733 = smul.addr %s732, 4
        %s734 = scalar_lea.vmem %s3, %s733
      $region52: #{resblock_down_forward.2} parent=47 // pred_fallthru
        _
    $region48: #{resblock_down_forward.2} parent=5 // pred_fallthru
      _
  $region6: #{resblock_down_forward.2} parent=0 // loop_footer
    %s13 = sadd.s32 1, %s9
  $region7: #{resblock_down_forward.2} parent=0 // loop_footer_branch
    %8 = sbr.rel target = $region3
  $region8: #{resblock_down_forward.2} parent=0 // loop_exit
    _

// kernel: resblock_down_forward.3
$region0: #{resblock_down_forward.3}
  #allocation0 [shape = 'u32[]', space=smem, size = 0x4, offset = 0x4, fixed_abs, tag = 'smem constant byte address 0x4 - core index']
  #allocation1 [shape = 'u32[144,128]{1,0:T(1,128)}', space=vmem, size = 0x12000, scoped, tag = 'internal scratch']
  #allocation2 [shape = 'f32[128,128]{1,0:T(8,128)}', space=vmem, size = 0x10000, scoped, tag = 'scratch operand']
  %s0 = inlined_call_operand.vmem [shape: bf16[128,128], index: 0, kind: input, shape index: {}]
  %s1 = inlined_call_operand.vmem [shape: bf16[128,128], index: 1, kind: input, shape index: {}]
  %s2 = inlined_call_operand.vmem [shape: bf16[128,128], index: 2, kind: input, shape index: {}]
  %s3 = inlined_call_operand.vmem [shape: bf16[128,128], index: 3, kind: input, shape index: {}]
  %s4 = inlined_call_operand.vmem [shape: f32[1,128], index: 4, kind: input, shape index: {}]
  %s5 = inlined_call_operand.vmem [shape: f32[128,128], index: 5, kind: output, shape index: {}]
  %s6 = sld [smem:[#allocation0]]
  $region38: #{resblock_down_forward.3} parent=0
    _
  %s8 = ssub.s32 1, %s6
  %s9 = scalar_select 0, %s8, %s6
  // Predicated region
  $region2: #{resblock_down_forward.3} parent=0 // pred_check
    _
  $region3: #{resblock_down_forward.3} parent=0 // pred_check_branch
    %11 = sbr.rel (0) target = $region5
  $region4: #{resblock_down_forward.3} parent=0 // pred_region
    _
  $region5: #{resblock_down_forward.3} parent=0 // pred_fallthru
    _
  // Predicated region
  $region6: #{resblock_down_forward.3} parent=0 // pred_check
    _
  $region7: #{resblock_down_forward.3} parent=0 // pred_check_branch
    %13 = sbr.rel (0) target = $region9
  $region8: #{resblock_down_forward.3} parent=0 // pred_region
    _
  $region9: #{resblock_down_forward.3} parent=0 // pred_fallthru
    _
  // Predicated region
  $region10: #{resblock_down_forward.3} parent=0 // pred_check
    _
  $region11: #{resblock_down_forward.3} parent=0 // pred_check_branch
    %15 = sbr.rel (0) target = $region13
  $region12: #{resblock_down_forward.3} parent=0 // pred_region
    _
  $region13: #{resblock_down_forward.3} parent=0 // pred_fallthru
    _
  // Predicated region
  $region14: #{resblock_down_forward.3} parent=0 // pred_check
    _
  $region15: #{resblock_down_forward.3} parent=0 // pred_check_branch
    %17 = sbr.rel (0) target = $region17
  $region16: #{resblock_down_forward.3} parent=0 // pred_region
    _
  $region17: #{resblock_down_forward.3} parent=0 // pred_fallthru
    _
  // Predicated region
  $region18: #{resblock_down_forward.3} parent=0 // pred_check
    _
  $region19: #{resblock_down_forward.3} parent=0 // pred_check_branch
    %19 = sbr.rel (0) target = $region21
  $region20: #{resblock_down_forward.3} parent=0 // pred_region
    _
  $region21: #{resblock_down_forward.3} parent=0 // pred_fallthru
    _
  %p21 = scmp.eq.s32.totalorder 0, 0
  // Predicated region
  $region22: #{resblock_down_forward.3} parent=0 // pred_check
    %p22 = pneg %p21
  $region23: #{resblock_down_forward.3} parent=0 // pred_check_branch
    %24 = sbr.rel (%p22) target = $region25
  $region24: #{resblock_down_forward.3} parent=0 // pred_region
    %25 = vst [vmem:[#allocation2] sm:$0xff] 0.0
    %26 = vst [vmem:[#allocation2 + $0x8] sm:$0xff] 0.0
    %27 = vst [vmem:[#allocation2 + $0x10] sm:$0xff] 0.0
    %28 = vst [vmem:[#allocation2 + $0x18] sm:$0xff] 0.0
    %29 = vst [vmem:[#allocation2 + $0x20] sm:$0xff] 0.0
    %30 = vst [vmem:[#allocation2 + $0x28] sm:$0xff] 0.0
    %31 = vst [vmem:[#allocation2 + $0x30] sm:$0xff] 0.0
    %32 = vst [vmem:[#allocation2 + $0x38] sm:$0xff] 0.0
    %33 = vst [vmem:[#allocation2 + $0x40] sm:$0xff] 0.0
    %34 = vst [vmem:[#allocation2 + $0x48] sm:$0xff] 0.0
    %35 = vst [vmem:[#allocation2 + $0x50] sm:$0xff] 0.0
    %36 = vst [vmem:[#allocation2 + $0x58] sm:$0xff] 0.0
    %37 = vst [vmem:[#allocation2 + $0x60] sm:$0xff] 0.0
    %38 = vst [vmem:[#allocation2 + $0x68] sm:$0xff] 0.0
    %39 = vst [vmem:[#allocation2 + $0x70] sm:$0xff] 0.0
    %40 = vst [vmem:[#allocation2 + $0x78] sm:$0xff] 0.0
  $region25: #{resblock_down_forward.3} parent=0 // pred_fallthru
    _
  %v41 = vld [vmem:[#allocation2] sm:$0xff]
  %v42 = vld [vmem:[#allocation2 + $0x8] sm:$0xff]
  %v43 = vld [vmem:[#allocation2 + $0x10] sm:$0xff]
  %v44 = vld [vmem:[#allocation2 + $0x18] sm:$0xff]
  %v45 = vld [vmem:[#allocation2 + $0x20] sm:$0xff]
  %v46 = vld [vmem:[#allocation2 + $0x28] sm:$0xff]
  %v47 = vld [vmem:[#allocation2 + $0x30] sm:$0xff]
  %v48 = vld [vmem:[#allocation2 + $0x38] sm:$0xff]
  %v49 = vld [vmem:[#allocation2 + $0x40] sm:$0xff]
  %v50 = vld [vmem:[#allocation2 + $0x48] sm:$0xff]
  %v51 = vld [vmem:[#allocation2 + $0x50] sm:$0xff]
  %v52 = vld [vmem:[#allocation2 + $0x58] sm:$0xff]
  %v53 = vld [vmem:[#allocation2 + $0x60] sm:$0xff]
  %v54 = vld [vmem:[#allocation2 + $0x68] sm:$0xff]
  %v55 = vld [vmem:[#allocation2 + $0x70] sm:$0xff]
  %v56 = vld [vmem:[#allocation2 + $0x78] sm:$0xff]
  %v57 = vld [vmem:[%s0] sm:$0xf]
  %v58 = vld [vmem:[%s0 + $0x4] sm:$0xf]
  %v59 = vld [vmem:[%s0 + $0x8] sm:$0xf]
  %v60 = vld [vmem:[%s0 + $0xc] sm:$0xf]
  %v61 = vld [vmem:[%s0 + $0x10] sm:$0xf]
  %v62 = vld [vmem:[%s0 + $0x14] sm:$0xf]
  %v63 = vld [vmem:[%s0 + $0x18] sm:$0xf]
  %v64 = vld [vmem:[%s0 + $0x1c] sm:$0xf]
  %v65 = vld [vmem:[%s0 + $0x20] sm:$0xf]
  %v66 = vld [vmem:[%s0 + $0x24] sm:$0xf]
  %v67 = vld [vmem:[%s0 + $0x28] sm:$0xf]
  %v68 = vld [vmem:[%s0 + $0x2c] sm:$0xf]
  %v69 = vld [vmem:[%s0 + $0x30] sm:$0xf]
  %v70 = vld [vmem:[%s0 + $0x34] sm:$0xf]
  %v71 = vld [vmem:[%s0 + $0x38] sm:$0xf]
  %v72 = vld [vmem:[%s0 + $0x3c] sm:$0xf]
  %v73 = vld [vmem:[%s2] sm:$0xf]
  %v74 = vld [vmem:[%s2 + $0x4] sm:$0xf]
  %v75 = vld [vmem:[%s2 + $0x8] sm:$0xf]
  %v76 = vld [vmem:[%s2 + $0xc] sm:$0xf]
  %v77 = vld [vmem:[%s2 + $0x10] sm:$0xf]
  %v78 = vld [vmem:[%s2 + $0x14] sm:$0xf]
  %v79 = vld [vmem:[%s2 + $0x18] sm:$0xf]
  %v80 = vld [vmem:[%s2 + $0x1c] sm:$0xf]
  %v81 = vld [vmem:[%s2 + $0x20] sm:$0xf]
  %v82 = vld [vmem:[%s2 + $0x24] sm:$0xf]
  %v83 = vld [vmem:[%s2 + $0x28] sm:$0xf]
  %v84 = vld [vmem:[%s2 + $0x2c] sm:$0xf]
  %v85 = vld [vmem:[%s2 + $0x30] sm:$0xf]
  %v86 = vld [vmem:[%s2 + $0x34] sm:$0xf]
  %v87 = vld [vmem:[%s2 + $0x38] sm:$0xf]
  %v88 = vld [vmem:[%s2 + $0x3c] sm:$0xf]
  %v105 = vunpack.c.l.b16 %v57
  %v106 = vunpack.c.l.b16 %v58
  %v107 = vunpack.c.l.b16 %v59
  %v108 = vunpack.c.l.b16 %v60
  %v109 = vunpack.c.l.b16 %v61
  %v110 = vunpack.c.l.b16 %v62
  %v111 = vunpack.c.l.b16 %v63
  %v112 = vunpack.c.l.b16 %v64
  %v113 = vunpack.c.l.b16 %v65
  %v114 = vunpack.c.l.b16 %v66
  %v115 = vunpack.c.l.b16 %v67
  %v116 = vunpack.c.l.b16 %v68
  %v117 = vunpack.c.l.b16 %v69
  %v118 = vunpack.c.l.b16 %v70
  %v119 = vunpack.c.l.b16 %v71
  %v120 = vunpack.c.l.b16 %v72
  %v121 = vpack.c.b16 %v106, %v105
  %v122 = vpack.c.b16 %v108, %v107
  %v123 = vpack.c.b16 %v110, %v109
  %v124 = vpack.c.b16 %v112, %v111
  %v125 = vpack.c.b16 %v114, %v113
  %v126 = vpack.c.b16 %v116, %v115
  %v127 = vpack.c.b16 %v118, %v117
  %v128 = vpack.c.b16 %v120, %v119
  %v153 = vunpack.c.l.b16 %v73
  %v154 = vunpack.c.l.b16 %v74
  %v155 = vunpack.c.l.b16 %v75
  %v156 = vunpack.c.l.b16 %v76
  %v157 = vunpack.c.l.b16 %v77
  %v158 = vunpack.c.l.b16 %v78
  %v159 = vunpack.c.l.b16 %v79
  %v160 = vunpack.c.l.b16 %v80
  %v161 = vunpack.c.l.b16 %v81
  %v162 = vunpack.c.l.b16 %v82
  %v163 = vunpack.c.l.b16 %v83
  %v164 = vunpack.c.l.b16 %v84
  %v165 = vunpack.c.l.b16 %v85
  %v166 = vunpack.c.l.b16 %v86
  %v167 = vunpack.c.l.b16 %v87
  %v168 = vunpack.c.l.b16 %v88
  %v169 = vpack.c.b16 %v154, %v153
  %v170 = vpack.c.b16 %v156, %v155
  %v171 = vpack.c.b16 %v158, %v157
  %v172 = vpack.c.b16 %v160, %v159
  %v173 = vpack.c.b16 %v162, %v161
  %v174 = vpack.c.b16 %v164, %v163
  %v175 = vpack.c.b16 %v166, %v165
  %v176 = vpack.c.b16 %v168, %v167
  %185 = vmatprep.subr.bf16.mxu0 0
  %186 = vmatpush1.bf16.msra.mxu0 %v169
  %187 = vmatprep.subr.bf16.mxu0 0
  %188 = vmatpush1.bf16.msra.mxu0 %v170
  %189 = vmatprep.subr.bf16.mxu0 0
  %190 = vmatpush1.bf16.msra.mxu0 %v171
  %191 = vmatprep.subr.bf16.mxu0 0
  %192 = vmatpush1.bf16.msra.mxu0 %v172
  %193 = vmatprep.subr.bf16.mxu0 0
  %194 = vmatpush1.bf16.msra.mxu0 %v173
  %195 = vmatprep.subr.bf16.mxu0 0
  %196 = vmatpush1.bf16.msra.mxu0 %v174
  %197 = vmatprep.subr.bf16.mxu0 0
  %198 = vmatpush1.bf16.msra.mxu0 %v175
  %199 = vmatprep.subr.bf16.mxu0 0
  %200 = vmatpush1.bf16.msra.mxu0 %v176
  %201 = vmatprep.subr.bf16.mxu0 0
  %202 = vmatpush1.bf16.msra.mxu0 0
  %203 = vmatprep.subr.bf16.mxu0 0
  %204 = vmatpush1.bf16.msra.mxu0 0
  %205 = vmatprep.subr.bf16.mxu0 0
  %206 = vmatpush1.bf16.msra.mxu0 0
  %207 = vmatprep.subr.bf16.mxu0 0
  %208 = vmatpush1.bf16.msra.mxu0 0
  %209 = vmatprep.subr.bf16.mxu0 0
  %210 = vmatpush1.bf16.msra.mxu0 0
  %211 = vmatprep.subr.bf16.mxu0 0
  %212 = vmatpush1.bf16.msra.mxu0 0
  %213 = vmatprep.subr.bf16.mxu0 0
  %214 = vmatpush1.bf16.msra.mxu0 0
  %215 = vmatprep.subr.bf16.mxu0 0
  %216 = vmatpush1.bf16.msra.mxu0 0
  %217 = vmatprep.mubr.bf16.mxu0 0
  %218 = vmatmul.mubr.bf16.gmra.mrb[0].mxu0 %v121
  %v219 = vpop.f32.mrb[0].mxu0
  %v220 = vadd.f32 0.0, %v219
  %v221 = vpop.f32.mrb[0].mxu0
  %v222 = vpop.f32.mrb[0].mxu0
  %v223 = vadd.f32 0.0, %v222
  %v224 = vpop.f32.mrb[0].mxu0
  %225 = vmatprep.mubr.bf16.mxu0 0
  %226 = vmatmul.mubr.bf16.gmra.mrb[0].mxu0 %v122
  %v227 = vpop.f32.mrb[0].mxu0
  %v228 = vadd.f32 0.0, %v227
  %v229 = vpop.f32.mrb[0].mxu0
  %v230 = vpop.f32.mrb[0].mxu0
  %v231 = vadd.f32 0.0, %v230
  %v232 = vpop.f32.mrb[0].mxu0
  %233 = vmatprep.mubr.bf16.mxu0 0
  %234 = vmatmul.mubr.bf16.gmra.mrb[0].mxu0 %v123
  %v235 = vpop.f32.mrb[0].mxu0
  %v236 = vadd.f32 0.0, %v235
  %v237 = vpop.f32.mrb[0].mxu0
  %v238 = vpop.f32.mrb[0].mxu0
  %v239 = vadd.f32 0.0, %v238
  %v240 = vpop.f32.mrb[0].mxu0
  %241 = vmatprep.mubr.bf16.mxu0 0
  %242 = vmatmul.mubr.bf16.gmra.mrb[0].mxu0 %v124
  %v243 = vpop.f32.mrb[0].mxu0
  %v244 = vadd.f32 0.0, %v243
  %v245 = vpop.f32.mrb[0].mxu0
  %v246 = vpop.f32.mrb[0].mxu0
  %v247 = vadd.f32 0.0, %v246
  %v248 = vpop.f32.mrb[0].mxu0
  %249 = vmatprep.mubr.bf16.mxu0 0
  %250 = vmatmul.mubr.bf16.gmra.mrb[0].mxu0 %v125
  %v251 = vpop.f32.mrb[0].mxu0
  %v252 = vadd.f32 0.0, %v251
  %v253 = vpop.f32.mrb[0].mxu0
  %v254 = vpop.f32.mrb[0].mxu0
  %v255 = vadd.f32 0.0, %v254
  %v256 = vpop.f32.mrb[0].mxu0
  %257 = vmatprep.mubr.bf16.mxu0 0
  %258 = vmatmul.mubr.bf16.gmra.mrb[0].mxu0 %v126
  %v259 = vpop.f32.mrb[0].mxu0
  %v260 = vadd.f32 0.0, %v259
  %v261 = vpop.f32.mrb[0].mxu0
  %v262 = vpop.f32.mrb[0].mxu0
  %v263 = vadd.f32 0.0, %v262
  %v264 = vpop.f32.mrb[0].mxu0
  %265 = vmatprep.mubr.bf16.mxu0 0
  %266 = vmatmul.mubr.bf16.gmra.mrb[0].mxu0 %v127
  %v267 = vpop.f32.mrb[0].mxu0
  %v268 = vadd.f32 0.0, %v267
  %v269 = vpop.f32.mrb[0].mxu0
  %v270 = vpop.f32.mrb[0].mxu0
  %v271 = vadd.f32 0.0, %v270
  %v272 = vpop.f32.mrb[0].mxu0
  %273 = vmatprep.mubr.bf16.mxu0 0
  %274 = vmatmul.mubr.bf16.gmra.mrb[0].mxu0 %v128
  %v275 = vpop.f32.mrb[0].mxu0
  %v276 = vadd.f32 0.0, %v275
  %v277 = vpop.f32.mrb[0].mxu0
  %v278 = vpop.f32.mrb[0].mxu0
  %v279 = vadd.f32 0.0, %v278
  %v280 = vpop.f32.mrb[0].mxu0
  %281 = vdwg.mxu0
  %v282 = vadd.f32 %v41, %v220
  %v283 = vadd.f32 %v42, %v223
  %v284 = vadd.f32 %v43, %v228
  %v285 = vadd.f32 %v44, %v231
  %v286 = vadd.f32 %v45, %v236
  %v287 = vadd.f32 %v46, %v239
  %v288 = vadd.f32 %v47, %v244
  %v289 = vadd.f32 %v48, %v247
  %v290 = vadd.f32 %v49, %v252
  %v291 = vadd.f32 %v50, %v255
  %v292 = vadd.f32 %v51, %v260
  %v293 = vadd.f32 %v52, %v263
  %v294 = vadd.f32 %v53, %v268
  %v295 = vadd.f32 %v54, %v271
  %v296 = vadd.f32 %v55, %v276
  %v297 = vadd.f32 %v56, %v279
  %v298 = vld [vmem:[%s1] sm:$0xf]
  %v299 = vld [vmem:[%s1 + $0x4] sm:$0xf]
  %v300 = vld [vmem:[%s1 + $0x8] sm:$0xf]
  %v301 = vld [vmem:[%s1 + $0xc] sm:$0xf]
  %v302 = vld [vmem:[%s1 + $0x10] sm:$0xf]
  %v303 = vld [vmem:[%s1 + $0x14] sm:$0xf]
  %v304 = vld [vmem:[%s1 + $0x18] sm:$0xf]
  %v305 = vld [vmem:[%s1 + $0x1c] sm:$0xf]
  %v306 = vld [vmem:[%s1 + $0x20] sm:$0xf]
  %v307 = vld [vmem:[%s1 + $0x24] sm:$0xf]
  %v308 = vld [vmem:[%s1 + $0x28] sm:$0xf]
  %v309 = vld [vmem:[%s1 + $0x2c] sm:$0xf]
  %v310 = vld [vmem:[%s1 + $0x30] sm:$0xf]
  %v311 = vld [vmem:[%s1 + $0x34] sm:$0xf]
  %v312 = vld [vmem:[%s1 + $0x38] sm:$0xf]
  %v313 = vld [vmem:[%s1 + $0x3c] sm:$0xf]
  %v314 = vld [vmem:[%s3] sm:$0xf]
  %v315 = vld [vmem:[%s3 + $0x4] sm:$0xf]
  %v316 = vld [vmem:[%s3 + $0x8] sm:$0xf]
  %v317 = vld [vmem:[%s3 + $0xc] sm:$0xf]
  %v318 = vld [vmem:[%s3 + $0x10] sm:$0xf]
  %v319 = vld [vmem:[%s3 + $0x14] sm:$0xf]
  %v320 = vld [vmem:[%s3 + $0x18] sm:$0xf]
  %v321 = vld [vmem:[%s3 + $0x1c] sm:$0xf]
  %v322 = vld [vmem:[%s3 + $0x20] sm:$0xf]
  %v323 = vld [vmem:[%s3 + $0x24] sm:$0xf]
  %v324 = vld [vmem:[%s3 + $0x28] sm:$0xf]
  %v325 = vld [vmem:[%s3 + $0x2c] sm:$0xf]
  %v326 = vld [vmem:[%s3 + $0x30] sm:$0xf]
  %v327 = vld [vmem:[%s3 + $0x34] sm:$0xf]
  %v328 = vld [vmem:[%s3 + $0x38] sm:$0xf]
  %v329 = vld [vmem:[%s3 + $0x3c] sm:$0xf]
  %v346 = vunpack.c.l.b16 %v298
  %v347 = vunpack.c.l.b16 %v299
  %v348 = vunpack.c.l.b16 %v300
  %v349 = vunpack.c.l.b16 %v301
  %v350 = vunpack.c.l.b16 %v302
  %v351 = vunpack.c.l.b16 %v303
  %v352 = vunpack.c.l.b16 %v304
  %v353 = vunpack.c.l.b16 %v305
  %v354 = vunpack.c.l.b16 %v306
  %v355 = vunpack.c.l.b16 %v307
  %v356 = vunpack.c.l.b16 %v308
  %v357 = vunpack.c.l.b16 %v309
  %v358 = vunpack.c.l.b16 %v310
  %v359 = vunpack.c.l.b16 %v311
  %v360 = vunpack.c.l.b16 %v312
  %v361 = vunpack.c.l.b16 %v313
  %v362 = vpack.c.b16 %v347, %v346
  %v363 = vpack.c.b16 %v349, %v348
  %v364 = vpack.c.b16 %v351, %v350
  %v365 = vpack.c.b16 %v353, %v352
  %v366 = vpack.c.b16 %v355, %v354
  %v367 = vpack.c.b16 %v357, %v356
  %v368 = vpack.c.b16 %v359, %v358
  %v369 = vpack.c.b16 %v361, %v360
  %v394 = vunpack.c.l.b16 %v314
  %v395 = vunpack.c.l.b16 %v315
  %v396 = vunpack.c.l.b16 %v316
  %v397 = vunpack.c.l.b16 %v317
  %v398 = vunpack.c.l.b16 %v318
  %v399 = vunpack.c.l.b16 %v319
  %v400 = vunpack.c.l.b16 %v320
  %v401 = vunpack.c.l.b16 %v321
  %v402 = vunpack.c.l.b16 %v322
  %v403 = vunpack.c.l.b16 %v323
  %v404 = vunpack.c.l.b16 %v324
  %v405 = vunpack.c.l.b16 %v325
  %v406 = vunpack.c.l.b16 %v326
  %v407 = vunpack.c.l.b16 %v327
  %v408 = vunpack.c.l.b16 %v328
  %v409 = vunpack.c.l.b16 %v329
  %v410 = vpack.c.b16 %v395, %v394
  %v411 = vpack.c.b16 %v397, %v396
  %v412 = vpack.c.b16 %v399, %v398
  %v413 = vpack.c.b16 %v401, %v400
  %v414 = vpack.c.b16 %v403, %v402
  %v415 = vpack.c.b16 %v405, %v404
  %v416 = vpack.c.b16 %v407, %v406
  %v417 = vpack.c.b16 %v409, %v408
  %426 = vmatprep.subr.bf16.mxu0 0
  %427 = vmatpush1.bf16.msra.mxu0 %v410
  %428 = vmatprep.subr.bf16.mxu0 0
  %429 = vmatpush1.bf16.msra.mxu0 %v411
  %430 = vmatprep.subr.bf16.mxu0 0
  %431 = vmatpush1.bf16.msra.mxu0 %v412
  %432 = vmatprep.subr.bf16.mxu0 0
  %433 = vmatpush1.bf16.msra.mxu0 %v413
  %434 = vmatprep.subr.bf16.mxu0 0
  %435 = vmatpush1.bf16.msra.mxu0 %v414
  %436 = vmatprep.subr.bf16.mxu0 0
  %437 = vmatpush1.bf16.msra.mxu0 %v415
  %438 = vmatprep.subr.bf16.mxu0 0
  %439 = vmatpush1.bf16.msra.mxu0 %v416
  %440 = vmatprep.subr.bf16.mxu0 0
  %441 = vmatpush1.bf16.msra.mxu0 %v417
  %442 = vmatprep.subr.bf16.mxu0 0
  %443 = vmatpush1.bf16.msra.mxu0 0
  %444 = vmatprep.subr.bf16.mxu0 0
  %445 = vmatpush1.bf16.msra.mxu0 0
  %446 = vmatprep.subr.bf16.mxu0 0
  %447 = vmatpush1.bf16.msra.mxu0 0
  %448 = vmatprep.subr.bf16.mxu0 0
  %449 = vmatpush1.bf16.msra.mxu0 0
  %450 = vmatprep.subr.bf16.mxu0 0
  %451 = vmatpush1.bf16.msra.mxu0 0
  %452 = vmatprep.subr.bf16.mxu0 0
  %453 = vmatpush1.bf16.msra.mxu0 0
  %454 = vmatprep.subr.bf16.mxu0 0
  %455 = vmatpush1.bf16.msra.mxu0 0
  %456 = vmatprep.subr.bf16.mxu0 0
  %457 = vmatpush1.bf16.msra.mxu0 0
  %458 = vmatprep.mubr.bf16.mxu0 0
  %459 = vmatmul.mubr.bf16.gmra.mrb[0].mxu0 %v362
  %v460 = vpop.f32.mrb[0].mxu0
  %v461 = vadd.f32 0.0, %v460
  %v462 = vpop.f32.mrb[0].mxu0
  %v463 = vpop.f32.mrb[0].mxu0
  %v464 = vadd.f32 0.0, %v463
  %v465 = vpop.f32.mrb[0].mxu0
  %466 = vmatprep.mubr.bf16.mxu0 0
  %467 = vmatmul.mubr.bf16.gmra.mrb[0].mxu0 %v363
  %v468 = vpop.f32.mrb[0].mxu0
  %v469 = vadd.f32 0.0, %v468
  %v470 = vpop.f32.mrb[0].mxu0
  %v471 = vpop.f32.mrb[0].mxu0
  %v472 = vadd.f32 0.0, %v471
  %v473 = vpop.f32.mrb[0].mxu0
  %474 = vmatprep.mubr.bf16.mxu0 0
  %475 = vmatmul.mubr.bf16.gmra.mrb[0].mxu0 %v364
  %v476 = vpop.f32.mrb[0].mxu0
  %v477 = vadd.f32 0.0, %v476
  %v478 = vpop.f32.mrb[0].mxu0
  %v479 = vpop.f32.mrb[0].mxu0
  %v480 = vadd.f32 0.0, %v479
  %v481 = vpop.f32.mrb[0].mxu0
  %482 = vmatprep.mubr.bf16.mxu0 0
  %483 = vmatmul.mubr.bf16.gmra.mrb[0].mxu0 %v365
  %v484 = vpop.f32.mrb[0].mxu0
  %v485 = vadd.f32 0.0, %v484
  %v486 = vpop.f32.mrb[0].mxu0
  %v487 = vpop.f32.mrb[0].mxu0
  %v488 = vadd.f32 0.0, %v487
  %v489 = vpop.f32.mrb[0].mxu0
  %490 = vmatprep.mubr.bf16.mxu0 0
  %491 = vmatmul.mubr.bf16.gmra.mrb[0].mxu0 %v366
  %v492 = vpop.f32.mrb[0].mxu0
  %v493 = vadd.f32 0.0, %v492
  %v494 = vpop.f32.mrb[0].mxu0
  %v495 = vpop.f32.mrb[0].mxu0
  %v496 = vadd.f32 0.0, %v495
  %v497 = vpop.f32.mrb[0].mxu0
  %498 = vmatprep.mubr.bf16.mxu0 0
  %499 = vmatmul.mubr.bf16.gmra.mrb[0].mxu0 %v367
  %v500 = vpop.f32.mrb[0].mxu0
  %v501 = vadd.f32 0.0, %v500
  %v502 = vpop.f32.mrb[0].mxu0
  %v503 = vpop.f32.mrb[0].mxu0
  %v504 = vadd.f32 0.0, %v503
  %v505 = vpop.f32.mrb[0].mxu0
  %506 = vmatprep.mubr.bf16.mxu0 0
  %507 = vmatmul.mubr.bf16.gmra.mrb[0].mxu0 %v368
  %v508 = vpop.f32.mrb[0].mxu0
  %v509 = vadd.f32 0.0, %v508
  %v510 = vpop.f32.mrb[0].mxu0
  %v511 = vpop.f32.mrb[0].mxu0
  %v512 = vadd.f32 0.0, %v511
  %v513 = vpop.f32.mrb[0].mxu0
  %514 = vmatprep.mubr.bf16.mxu0 0
  %515 = vmatmul.mubr.bf16.gmra.mrb[0].mxu0 %v369
  %v516 = vpop.f32.mrb[0].mxu0
  %v517 = vadd.f32 0.0, %v516
  %v518 = vpop.f32.mrb[0].mxu0
  %v519 = vpop.f32.mrb[0].mxu0
  %v520 = vadd.f32 0.0, %v519
  %v521 = vpop.f32.mrb[0].mxu0
  %522 = vdwg.mxu0
  %v523 = vadd.f32 %v282, %v461
  %v524 = vadd.f32 %v283, %v464
  %v525 = vadd.f32 %v284, %v469
  %v526 = vadd.f32 %v285, %v472
  %v527 = vadd.f32 %v286, %v477
  %v528 = vadd.f32 %v287, %v480
  %v529 = vadd.f32 %v288, %v485
  %v530 = vadd.f32 %v289, %v488
  %v531 = vadd.f32 %v290, %v493
  %v532 = vadd.f32 %v291, %v496
  %v533 = vadd.f32 %v292, %v501
  %v534 = vadd.f32 %v293, %v504
  %v535 = vadd.f32 %v294, %v509
  %v536 = vadd.f32 %v295, %v512
  %v537 = vadd.f32 %v296, %v517
  %v538 = vadd.f32 %v297, %v520
  %539 = vst [vmem:[#allocation2] sm:$0xff] %v523
  %540 = vst [vmem:[#allocation2 + $0x8] sm:$0xff] %v524
  %541 = vst [vmem:[#allocation2 + $0x10] sm:$0xff] %v525
  %542 = vst [vmem:[#allocation2 + $0x18] sm:$0xff] %v526
  %543 = vst [vmem:[#allocation2 + $0x20] sm:$0xff] %v527
  %544 = vst [vmem:[#allocation2 + $0x28] sm:$0xff] %v528
  %545 = vst [vmem:[#allocation2 + $0x30] sm:$0xff] %v529
  %546 = vst [vmem:[#allocation2 + $0x38] sm:$0xff] %v530
  %547 = vst [vmem:[#allocation2 + $0x40] sm:$0xff] %v531
  %548 = vst [vmem:[#allocation2 + $0x48] sm:$0xff] %v532
  %549 = vst [vmem:[#allocation2 + $0x50] sm:$0xff] %v533
  %550 = vst [vmem:[#allocation2 + $0x58] sm:$0xff] %v534
  %551 = vst [vmem:[#allocation2 + $0x60] sm:$0xff] %v535
  %552 = vst [vmem:[#allocation2 + $0x68] sm:$0xff] %v536
  %553 = vst [vmem:[#allocation2 + $0x70] sm:$0xff] %v537
  %554 = vst [vmem:[#allocation2 + $0x78] sm:$0xff] %v538
  // Predicated region
  $region26: #{resblock_down_forward.3} parent=0 // pred_check
    %p555 = pneg %p21
  $region27: #{resblock_down_forward.3} parent=0 // pred_check_branch
    %557 = sbr.rel (%p555) target = $region29
  $region28: #{resblock_down_forward.3} parent=0 // pred_region
    %v558 = vld [vmem:[#allocation2] sm:$0xff]
    %v559 = vld [vmem:[#allocation2 + $0x8] sm:$0xff]
    %v560 = vld [vmem:[#allocation2 + $0x10] sm:$0xff]
    %v561 = vld [vmem:[#allocation2 + $0x18] sm:$0xff]
    %v562 = vld [vmem:[#allocation2 + $0x20] sm:$0xff]
    %v563 = vld [vmem:[#allocation2 + $0x28] sm:$0xff]
    %v564 = vld [vmem:[#allocation2 + $0x30] sm:$0xff]
    %v565 = vld [vmem:[#allocation2 + $0x38] sm:$0xff]
    %v566 = vld [vmem:[#allocation2 + $0x40] sm:$0xff]
    %v567 = vld [vmem:[#allocation2 + $0x48] sm:$0xff]
    %v568 = vld [vmem:[#allocation2 + $0x50] sm:$0xff]
    %v569 = vld [vmem:[#allocation2 + $0x58] sm:$0xff]
    %v570 = vld [vmem:[#allocation2 + $0x60] sm:$0xff]
    %v571 = vld [vmem:[#allocation2 + $0x68] sm:$0xff]
    %v572 = vld [vmem:[#allocation2 + $0x70] sm:$0xff]
    %v573 = vld [vmem:[#allocation2 + $0x78] sm:$0xff]
    %v574 = vld [vmem:[%s4] sm:$0x1]
    %v576 = vlaneseq
    %v577 = vshrl.u32 %v576, 7
    %v578 = vsub.s32 0, %v577
    %v579 = vrot.slane %v574, %v578
    %v581 = vadd.f32 %v558, %v579
    %v582 = vadd.f32 %v559, %v579
    %v583 = vadd.f32 %v560, %v579
    %v584 = vadd.f32 %v561, %v579
    %v585 = vadd.f32 %v562, %v579
    %v586 = vadd.f32 %v563, %v579
    %v587 = vadd.f32 %v564, %v579
    %v588 = vadd.f32 %v565, %v579
    %v589 = vadd.f32 %v566, %v579
    %v590 = vadd.f32 %v567, %v579
    %v591 = vadd.f32 %v568, %v579
    %v592 = vadd.f32 %v569, %v579
    %v593 = vadd.f32 %v570, %v579
    %v594 = vadd.f32 %v571, %v579
    %v595 = vadd.f32 %v572, %v579
    %v596 = vadd.f32 %v573, %v579
    %v597 = vmul.f32 %v581, 0.2
    %v598 = vmul.f32 %v582, 0.2
    %v599 = vmul.f32 %v583, 0.2
    %v600 = vmul.f32 %v584, 0.2
    %v601 = vmul.f32 %v585, 0.2
    %v602 = vmul.f32 %v586, 0.2
    %v603 = vmul.f32 %v587, 0.2
    %v604 = vmul.f32 %v588, 0.2
    %v605 = vmul.f32 %v589, 0.2
    %v606 = vmul.f32 %v590, 0.2
    %v607 = vmul.f32 %v591, 0.2
    %v608 = vmul.f32 %v592, 0.2
    %v609 = vmul.f32 %v593, 0.2
    %v610 = vmul.f32 %v594, 0.2
    %v611 = vmul.f32 %v595, 0.2
    %v612 = vmul.f32 %v596, 0.2
    %v613 = vmax.f32 %v581, %v597
    %v614 = vmax.f32 %v582, %v598
    %v615 = vmax.f32 %v583, %v599
    %v616 = vmax.f32 %v584, %v600
    %v617 = vmax.f32 %v585, %v601
    %v618 = vmax.f32 %v586, %v602
    %v619 = vmax.f32 %v587, %v603
    %v620 = vmax.f32 %v588, %v604
    %v621 = vmax.f32 %v589, %v605
    %v622 = vmax.f32 %v590, %v606
    %v623 = vmax.f32 %v591, %v607
    %v624 = vmax.f32 %v592, %v608
    %v625 = vmax.f32 %v593, %v609
    %v626 = vmax.f32 %v594, %v610
    %v627 = vmax.f32 %v595, %v611
    %v628 = vmax.f32 %v596, %v612
    %629 = vst [vmem:[%s5] sm:$0xff] %v613
    %630 = vst [vmem:[%s5 + $0x8] sm:$0xff] %v614
    %631 = vst [vmem:[%s5 + $0x10] sm:$0xff] %v615
    %632 = vst [vmem:[%s5 + $0x18] sm:$0xff] %v616
    %633 = vst [vmem:[%s5 + $0x20] sm:$0xff] %v617
    %634 = vst [vmem:[%s5 + $0x28] sm:$0xff] %v618
    %635 = vst [vmem:[%s5 + $0x30] sm:$0xff] %v619
    %636 = vst [vmem:[%s5 + $0x38] sm:$0xff] %v620
    %637 = vst [vmem:[%s5 + $0x40] sm:$0xff] %v621
    %638 = vst [vmem:[%s5 + $0x48] sm:$0xff] %v622
    %639 = vst [vmem:[%s5 + $0x50] sm:$0xff] %v623
    %640 = vst [vmem:[%s5 + $0x58] sm:$0xff] %v624
    %641 = vst [vmem:[%s5 + $0x60] sm:$0xff] %v625
    %642 = vst [vmem:[%s5 + $0x68] sm:$0xff] %v626
    %643 = vst [vmem:[%s5 + $0x70] sm:$0xff] %v627
    %644 = vst [vmem:[%s5 + $0x78] sm:$0xff] %v628
  $region29: #{resblock_down_forward.3} parent=0 // pred_fallthru
    _
  // Predicated region
  $region30: #{resblock_down_forward.3} parent=0 // pred_check
    _
  $region31: #{resblock_down_forward.3} parent=0 // pred_check_branch
    %646 = sbr.rel (0) target = $region33
  $region32: #{resblock_down_forward.3} parent=0 // pred_region
    _
  $region33: #{resblock_down_forward.3} parent=0 // pred_fallthru
    _
  // Predicated region
  $region34: #{resblock_down_forward.3} parent=0 // pred_check
    _
  $region35: #{resblock_down_forward.3} parent=0 // pred_check_branch
    %648 = sbr.rel (0) target = $region37
  $region36: #{resblock_down_forward.3} parent=0 // pred_region
    _
  $region37: #{resblock_down_forward.3} parent=0 // pred_fallthru
    _

</llo_original>
